<compile_context>
chip_gen: v7x
topology: tpu7x:2x2x1
jax: 0.10.0
libtpu: 0.0.40
codegen_flags: <defaults>
</compile_context>

<pallas_src>
import functools

import jax
import jax.numpy as jnp
from jax.experimental import pallas as pl
from jax.experimental.pallas import tpu as pltpu


def _round_up(n, m):
    return -(-n // m) * m


def _bf16_elementwise_ok():
    """bf16 VPU/EUP datapath exists on v6e/v7x; keep f32 elsewhere (v5e etc.)."""
    try:
        kind = jax.devices()[0].device_kind.lower()
    except Exception:
        return False
    return ("v6" in kind) or ("v7" in kind)


def wavenet_kernel(x_ref, w_ref, f_ref, o_ref, *, dilations, kernel_size,
                   num_channels, output_channels, input_channels, time_len,
                   ew_bf16):
    C = num_channels
    K = kernel_size
    T = time_len
    OUT = output_channels
    C_in = input_channels
    L = len(dilations)
    BT = x_ref.shape[-1]
    bf = jnp.bfloat16
    ew = bf if ew_bf16 else jnp.float32

    # --- static row offsets into the packed operand slabs --------------------
    # f_ref (f32, width 1): [w_in columns | b_in | b_h | b_r | b_mix]
    off_win = 0
    off_bin = off_win + C_in * C
    off_bh = off_bin + C
    off_br = off_bh + L * 2 * C
    off_bmix = off_br + L * C
    # w_ref (bf16, width K*C): [per-layer hidden (2C, K*C) | per-layer fused
    # residual+mix (rm_pad, K*C); only the first C cols / C+OUT rows are used]
    rm_rows = C + OUT
    rm_pad = _round_up(rm_rows, 16)
    off_wrm = L * 2 * C

    # Local time index within each length-T sequence (sequences are packed as
    # contiguous length-T segments along the lane axis).  Causal masks are
    # hoisted out of the layer loop; they zero-fill the first `s` samples of
    # each sequence AND kill the lane-roll wraparound.
    t_local = jax.lax.broadcasted_iota(jnp.int32, (1, BT), 1) % T
    shifts = sorted({(K - 1 - k) * d for d in dilations for k in range(K)} - {0})
    causal_mask = {s: t_local >= s for s in shifts}

    # input_layer: CausalConv1d(kernel_size=1).  Contraction dim is C_in
    # (tiny), so use VPU broadcast-FMAs instead of a sliver MXU matmul.
    x_f = x_ref[...]
    out = jnp.zeros((C, BT), jnp.float32) + f_ref[off_bin:off_bin + C, :]
    for c in range(C_in):
        w_col = f_ref[off_win + c * C:off_win + (c + 1) * C, :]   # (C, 1)
        out = out + w_col * x_f[c:c + 1, :]

    mix_acc = jnp.zeros((OUT, BT), jnp.float32)
    for li, d in enumerate(dilations):
        xi = out                                    # f32 residual stream
        xi_e = out.astype(ew)
        # K causally shifted taps stacked along channels so the whole dilated
        # conv is ONE matmul with contraction dim K*C.  Shifts are lane rolls
        # (XLU) + causal masks (VPU).
        taps = []
        for k in range(K):
            s = (K - 1 - k) * d
            if s == 0:
                taps.append(xi_e)
            else:
                rolled = pltpu.roll(xi_e, shift=s, axis=1)
                taps.append(jnp.where(causal_mask[s], rolled,
                                      jnp.zeros_like(rolled)))
        stacked = jnp.concatenate(taps, axis=0).astype(bf)        # (K*C, BT)

        acc = jnp.dot(w_ref[li * 2 * C:(li + 1) * 2 * C, :], stacked,
                      preferred_element_type=jnp.float32)
        acc = acc + f_ref[off_bh + li * 2 * C:off_bh + (li + 1) * 2 * C, :]

        # Gated activation: tanh(first half) * sigmoid(second half).
        # bf16 EUP/VPU on v6e/v7x, f32 on v5e.
        if ew_bf16:
            gated_b = (jnp.tanh(acc[:C, :].astype(bf)) *
                       jax.nn.sigmoid(acc[C:, :].astype(bf)))
        else:
            gated_b = (jnp.tanh(acc[:C, :]) *
                       jax.nn.sigmoid(acc[C:, :])).astype(bf)

        # Fused residual 1x1 conv + per-layer skip-mix slice: ONE MXU call,
        # rows [:C] feed the residual path, rows [C:C+OUT] the skip mixing.
        r0 = off_wrm + li * rm_pad
        rm = jnp.dot(w_ref[r0:r0 + rm_pad, :C], gated_b,
                     preferred_element_type=jnp.float32)          # (rm_pad, BT)
        out = rm[:C, :] + f_ref[off_br + li * C:off_br + (li + 1) * C, :] + xi
        mix_acc = mix_acc + rm[C:rm_rows, :]

    o_ref[...] = (mix_acc + f_ref[off_bmix:off_bmix + OUT, :]).astype(o_ref.dtype)


@functools.partial(jax.jit,
                   static_argnames=("dilations", "kernel_size",
                                    "num_channels", "output_channels"))
def wavenet_forward(x, params, *, dilations, kernel_size, num_channels,
                    output_channels):
    (w_in, b_in, w_h, b_h, w_r, b_r, w_mix, b_mix) = params
    B, C_in, T = x.shape
    L = len(dilations)
    C = num_channels
    K = kernel_size
    OUT = output_channels
    bf = jnp.bfloat16

    # --- host-side layout plumbing -------------------------------------------
    # Activations: (channels, batch*time).  IMPORTANT: packing is [b, t]
    # row-major, i.e. contiguous length-T segments per sequence; the in-kernel
    # causal masks (and the per-sequence grid blocks) rely on this.
    x2 = jnp.transpose(x, (1, 0, 2)).reshape(C_in, B * T)

    # Hidden conv weights packed so the K taps share one contraction: (L,2C,K*C).
    w_h_packed = jnp.transpose(w_h, (0, 2, 1, 3)).reshape(L, 2 * C, K * C)
    # Per-layer slices of linear_mix, fused with the residual 1x1 conv into a
    # single (C+OUT, C) weight per layer; padded so each layer block starts on
    # a bf16 sublane-pack boundary and shares the hidden slab's column width.
    w_mix_packed = jnp.transpose(w_mix.reshape(OUT, L, C), (1, 0, 2))
    rm_rows = C + OUT
    rm_pad = _round_up(rm_rows, 16)
    w_rm = jnp.concatenate([w_r, w_mix_packed], axis=1)           # (L, C+OUT, C)
    w_rm = jnp.pad(w_rm, ((0, 0), (0, rm_pad - rm_rows), (0, K * C - C)))
    w_slab = jnp.concatenate([w_h_packed.reshape(L * 2 * C, K * C),
                              w_rm.reshape(L * rm_pad, K * C)],
                             axis=0).astype(bf)
    # f32 slab: input-layer weight columns + all biases (width 1).
    f_slab = jnp.concatenate([
        jnp.transpose(w_in).reshape(C_in * C, 1),
        b_in.reshape(C, 1),
        b_h.reshape(L * 2 * C, 1),
        b_r.reshape(L * C, 1),
        b_mix.reshape(OUT, 1),
    ], axis=0).astype(jnp.float32)

    # One whole sequence per grid step ("parallel" -> v7x's second TensorCore
    # takes half the batch); fall back to a single full-BT block if T isn't
    # lane-aligned.
    if T % 128 == 0 and B > 1:
        grid = (B,)
        block_bt = T
    else:
        grid = (1,)
        block_bt = B * T

    kernel = functools.partial(
        wavenet_kernel,
        dilations=tuple(dilations), kernel_size=K, num_channels=C,
        output_channels=OUT, input_channels=C_in, time_len=T,
        ew_bf16=_bf16_elementwise_ok())

    out2 = pl.pallas_call(
        kernel,
        out_shape=jax.ShapeDtypeStruct((OUT, B * T), jnp.float32),
        grid=grid,
        in_specs=[
            pl.BlockSpec((C_in, block_bt), lambda b: (0, b)),
            pl.BlockSpec(w_slab.shape, lambda b: (0, 0)),
            pl.BlockSpec(f_slab.shape, lambda b: (0, 0)),
        ],
        out_specs=pl.BlockSpec((OUT, block_bt), lambda b: (0, b)),
        compiler_params=pltpu.CompilerParams(
            dimension_semantics=("parallel",)),
    )(x2, w_slab, f_slab)
    return jnp.transpose(out2.reshape(OUT, B, T), (1, 0, 2))


def init_params(key, input_channels, output_channels, num_channels,
                dilation_depth, num_blocks, kernel_size):
    L = dilation_depth * num_blocks
    C = num_channels
    ks = jax.random.split(key, 8)
    s = 0.1
    w_in = s * jax.random.normal(ks[0], (C, input_channels), jnp.float32)
    b_in = s * jax.random.normal(ks[1], (C, 1), jnp.float32)
    w_h = s * jax.random.normal(ks[2], (L, kernel_size, 2 * C, C), jnp.float32)
    b_h = s * jax.random.normal(ks[3], (L, 2 * C, 1), jnp.float32)
    w_r = s * jax.random.normal(ks[4], (L, C, C), jnp.float32)
    b_r = s * jax.random.normal(ks[5], (L, C, 1), jnp.float32)
    w_mix = s * jax.random.normal(ks[6], (output_channels, C * L), jnp.float32)
    b_mix = s * jax.random.normal(ks[7], (output_channels, 1), jnp.float32)
    return (w_in, b_in, w_h, b_h, w_r, b_r, w_mix, b_mix)


def wavenet_ref(x, params, dilations, kernel_size, num_channels):
    """Pure-JAX reference mirroring the PyTorch forward semantics."""
    (w_in, b_in, w_h, b_h, w_r, b_r, w_mix, b_mix) = params
    C = num_channels
    K = kernel_size
    B, _, T = x.shape
    out = jnp.einsum('oc,bct->bot', w_in, x) + b_in[None]
    skips = []
    for li, d in enumerate(dilations):
        xi = out
        acc = jnp.zeros((B, 2 * C, T), jnp.float32) + b_h[li][None]
        for k in range(K):
            s = (K - 1 - k) * d
            if s == 0:
                shifted = xi
            else:
                shifted = jnp.concatenate(
                    [jnp.zeros((B, C, s), xi.dtype), xi[:, :, :T - s]],
                    axis=-1)
            acc = acc + jnp.einsum('oc,bct->bot', w_h[li, k], shifted)
        gated = jnp.tanh(acc[:, :C]) * jax.nn.sigmoid(acc[:, C:])
        skips.append(gated)
        out = jnp.einsum('oc,bct->bot', w_r[li], gated) + b_r[li][None] + xi
    skip_cat = jnp.concatenate(skips, axis=1)
    return jnp.einsum('oc,bct->bot', w_mix, skip_cat) + b_mix[None]


if __name__ == "__main__":
    # WaveNet(input_channels=2, output_channels=2, num_channels=16,
    #         dilation_depth=3, num_blocks=2, kernel_size=3)
    input_channels = 2
    output_channels = 2
    num_channels = 16
    dilation_depth = 3
    num_blocks = 2
    kernel_size = 3
    B, T = 2, 128

    dilations = tuple([2 ** d for d in range(dilation_depth)] * num_blocks)

    key = jax.random.PRNGKey(0)
    pkey, xkey = jax.random.split(key)
    params = init_params(pkey, input_channels, output_channels, num_channels,
                         dilation_depth, num_blocks, kernel_size)
    x = jax.random.normal(xkey, (B, input_channels, T), jnp.float32)

    out = wavenet_forward(
        x, params,
        dilations=dilations,
        kernel_size=kernel_size,
        num_channels=num_channels,
        output_channels=output_channels,
    )
    out = jax.block_until_ready(out)

    ref = wavenet_ref(x, params, dilations, kernel_size, num_channels)
    assert out.shape == (B, output_channels, T)
    max_err = float(jnp.max(jnp.abs(out - ref)))
    assert max_err < 3e-2, f"mismatch vs reference, max abs err = {max_err}"
    print("KERNEL_OK")
</pallas_src>

<mosaic_0001>
module attributes {stable_mosaic.version = 11 : i64} {
  func.func @wavenet_kernel(%arg0: i32, %arg1: memref<2x128xf32, #tpu.memory_space<vmem>>, %arg2: memref<384x48xbf16, #tpu.memory_space<vmem>>, %arg3: memref<338x1xf32, #tpu.memory_space<vmem>>, %arg4: memref<2x128xf32, #tpu.memory_space<vmem>>) attributes {dimension_semantics = [#tpu.dimension_semantics<parallel>], iteration_bounds = array<i64: 2>, scalar_prefetch = 0 : i64, scratch_operands = 0 : i64, tpu.core_type = #tpu.core_type<tc>, window_params = [{transform_indices = @transform_0, window_bounds = array<i64: 2, 128>}, {pipeline_mode = #tpu.pipeline_mode<synchronous>, transform_indices = @transform_1, window_bounds = array<i64: 384, 48>}, {pipeline_mode = #tpu.pipeline_mode<synchronous>, transform_indices = @transform_2, window_bounds = array<i64: 338, 1>}, {transform_indices = @transform_3, window_bounds = array<i64: 2, 128>}]} {
    %0 = tpu.iota {dimensions = array<i32: 1>} : vector<1x128xi32>
    %c128_i32 = arith.constant 128 : i32
    %c0_i32 = arith.constant 0 : i32
    %1 = arith.cmpi eq, %c128_i32, %c0_i32 : i32
    %c1_i32 = arith.constant 1 : i32
    %2 = arith.select %1, %c1_i32, %c128_i32 : i32
    %3 = vector.broadcast %2 : i32 to vector<1x128xi32>
    %4 = arith.remsi %0, %3 : vector<1x128xi32>
    %c0_i32_0 = arith.constant 0 : i32
    %5 = vector.broadcast %c0_i32_0 : i32 to vector<1x128xi32>
    %6 = arith.cmpi ne, %4, %5 : vector<1x128xi32>
    %c0_i32_1 = arith.constant 0 : i32
    %7 = vector.broadcast %c0_i32_1 : i32 to vector<1x128xi32>
    %8 = arith.cmpi slt, %4, %7 : vector<1x128xi32>
    %c0_i32_2 = arith.constant 0 : i32
    %9 = arith.cmpi slt, %2, %c0_i32_2 : i32
    %10 = vector.broadcast %9 : i1 to vector<1x128xi1>
    %11 = vector.broadcast %10 : vector<1x128xi1> to vector<1x128xi1>
    %12 = arith.xori %8, %11 : vector<1x128xi1>
    %13 = arith.andi %12, %6 : vector<1x128xi1>
    %14 = vector.broadcast %2 : i32 to vector<1x128xi32>
    %15 = arith.addi %4, %14 : vector<1x128xi32>
    %16 = arith.select %13, %15, %4 : vector<1x128xi1>, vector<1x128xi32>
    %c1_i32_3 = arith.constant 1 : i32
    %17 = vector.broadcast %c1_i32_3 : i32 to vector<1x128xi32>
    %18 = arith.cmpi sge, %16, %17 : vector<1x128xi32>
    %c2_i32 = arith.constant 2 : i32
    %19 = vector.broadcast %c2_i32 : i32 to vector<1x128xi32>
    %20 = arith.cmpi sge, %16, %19 : vector<1x128xi32>
    %c4_i32 = arith.constant 4 : i32
    %21 = vector.broadcast %c4_i32 : i32 to vector<1x128xi32>
    %22 = arith.cmpi sge, %16, %21 : vector<1x128xi32>
    %c8_i32 = arith.constant 8 : i32
    %23 = vector.broadcast %c8_i32 : i32 to vector<1x128xi32>
    %24 = arith.cmpi sge, %16, %23 : vector<1x128xi32>
    %c0 = arith.constant 0 : index
    %c0_4 = arith.constant 0 : index
    %25 = vector.load %arg1[%c0, %c0_4] : memref<2x128xf32, #tpu.memory_space<vmem>>, vector<2x128xf32>
    %cst = arith.constant 0.000000e+00 : f32
    %26 = vector.broadcast %cst : f32 to vector<16x128xf32>
    %c32 = arith.constant 32 : index
    %c0_5 = arith.constant 0 : index
    %27 = vector.load %arg3[%c32, %c0_5] : memref<338x1xf32, #tpu.memory_space<vmem>>, vector<16x1xf32>
    %28 = vector.broadcast %27 : vector<16x1xf32> to vector<16x128xf32>
    %29 = arith.addf %26, %28 : vector<16x128xf32>
    %c0_6 = arith.constant 0 : index
    %c0_7 = arith.constant 0 : index
    %30 = vector.load %arg3[%c0_6, %c0_7] : memref<338x1xf32, #tpu.memory_space<vmem>>, vector<16x1xf32>
    %31 = vector.extract_strided_slice %25 {offsets = [0, 0], sizes = [1, 128], strides = [1, 1]} : vector<2x128xf32> to vector<1x128xf32>
    %32 = vector.broadcast %30 : vector<16x1xf32> to vector<16x128xf32>
    %33 = vector.broadcast %31 : vector<1x128xf32> to vector<16x128xf32>
    %34 = arith.mulf %32, %33 : vector<16x128xf32>
    %35 = arith.addf %29, %34 : vector<16x128xf32>
    %c16 = arith.constant 16 : index
    %c0_8 = arith.constant 0 : index
    %36 = vector.load %arg3[%c16, %c0_8] : memref<338x1xf32, #tpu.memory_space<vmem>>, vector<16x1xf32>
    %37 = vector.extract_strided_slice %25 {offsets = [1, 0], sizes = [1, 128], strides = [1, 1]} : vector<2x128xf32> to vector<1x128xf32>
    %38 = vector.broadcast %36 : vector<16x1xf32> to vector<16x128xf32>
    %39 = vector.broadcast %37 : vector<1x128xf32> to vector<16x128xf32>
    %40 = arith.mulf %38, %39 : vector<16x128xf32>
    %41 = arith.addf %35, %40 : vector<16x128xf32>
    %cst_9 = arith.constant 0.000000e+00 : f32
    %42 = vector.broadcast %cst_9 : f32 to vector<2x128xf32>
    %c2_i32_10 = arith.constant 2 : i32
    %43 = tpu.dynamic_rotate %41 by %c2_i32_10 dim 1 : vector<16x128xf32>, i32 -> vector<16x128xf32>
    %cst_11 = arith.constant 0.000000e+00 : f32
    %44 = vector.broadcast %cst_11 : f32 to vector<16x128xf32>
    %45 = vector.shape_cast %20 : vector<1x128xi1> to vector<1x128xi1>
    %46 = vector.broadcast %45 : vector<1x128xi1> to vector<16x128xi1>
    %47 = arith.select %46, %43, %44 : vector<16x128xi1>, vector<16x128xf32>
    %c1_i32_12 = arith.constant 1 : i32
    %48 = tpu.dynamic_rotate %41 by %c1_i32_12 dim 1 : vector<16x128xf32>, i32 -> vector<16x128xf32>
    %cst_13 = arith.constant 0.000000e+00 : f32
    %49 = vector.broadcast %cst_13 : f32 to vector<16x128xf32>
    %50 = vector.shape_cast %18 : vector<1x128xi1> to vector<1x128xi1>
    %51 = vector.broadcast %50 : vector<1x128xi1> to vector<16x128xi1>
    %52 = arith.select %51, %48, %49 : vector<16x128xi1>, vector<16x128xf32>
    %53 = tpu.concatenate %47, %52, %41 in 0 : vector<16x128xf32>, vector<16x128xf32>, vector<16x128xf32> -> vector<48x128xf32>
    %54 = arith.truncf %53 : vector<48x128xf32> to vector<48x128xbf16>
    %c0_14 = arith.constant 0 : index
    %c0_15 = arith.constant 0 : index
    %55 = vector.load %arg2[%c0_14, %c0_15] : memref<384x48xbf16, #tpu.memory_space<vmem>>, vector<32x48xbf16>
    %cst_16 = arith.constant dense<0.000000e+00> : vector<32x128xf32>
    %56 = tpu.matmul %55, %54, %cst_16 {dimension_numbers = #tpu.dot_dimension_numbers<[1], [0], [0], [1], [0, 0, 1, 1], [], []>} : vector<32x48xbf16>, vector<48x128xbf16>, vector<32x128xf32> -> vector<32x128xf32>
    %c48 = arith.constant 48 : index
    %c0_17 = arith.constant 0 : index
    %57 = vector.load %arg3[%c48, %c0_17] : memref<338x1xf32, #tpu.memory_space<vmem>>, vector<32x1xf32>
    %58 = vector.broadcast %57 : vector<32x1xf32> to vector<32x128xf32>
    %59 = arith.addf %56, %58 : vector<32x128xf32>
    %60 = vector.extract_strided_slice %59 {offsets = [0, 0], sizes = [16, 128], strides = [1, 1]} : vector<32x128xf32> to vector<16x128xf32>
    %61 = math.tanh %60 : vector<16x128xf32>
    %62 = vector.extract_strided_slice %59 {offsets = [16, 0], sizes = [16, 128], strides = [1, 1]} : vector<32x128xf32> to vector<16x128xf32>
    %63 = arith.negf %62 : vector<16x128xf32>
    %64 = math.exp %63 : vector<16x128xf32>
    %cst_18 = arith.constant 1.000000e+00 : f32
    %65 = vector.broadcast %cst_18 : f32 to vector<16x128xf32>
    %66 = arith.addf %65, %64 : vector<16x128xf32>
    %67 = arith.divf %65, %66 : vector<16x128xf32>
    %68 = arith.mulf %61, %67 : vector<16x128xf32>
    %69 = arith.truncf %68 : vector<16x128xf32> to vector<16x128xbf16>
    %c192 = arith.constant 192 : index
    %c0_19 = arith.constant 0 : index
    %70 = vector.load %arg2[%c192, %c0_19] : memref<384x48xbf16, #tpu.memory_space<vmem>>, vector<32x16xbf16>
    %cst_20 = arith.constant dense<0.000000e+00> : vector<32x128xf32>
    %71 = tpu.matmul %70, %69, %cst_20 {dimension_numbers = #tpu.dot_dimension_numbers<[1], [0], [0], [1], [0, 0, 1, 1], [], []>} : vector<32x16xbf16>, vector<16x128xbf16>, vector<32x128xf32> -> vector<32x128xf32>
    %72 = vector.extract_strided_slice %71 {offsets = [0, 0], sizes = [16, 128], strides = [1, 1]} : vector<32x128xf32> to vector<16x128xf32>
    %c240 = arith.constant 240 : index
    %c0_21 = arith.constant 0 : index
    %73 = vector.load %arg3[%c240, %c0_21] : memref<338x1xf32, #tpu.memory_space<vmem>>, vector<16x1xf32>
    %74 = vector.broadcast %73 : vector<16x1xf32> to vector<16x128xf32>
    %75 = arith.addf %72, %74 : vector<16x128xf32>
    %76 = arith.addf %75, %41 : vector<16x128xf32>
    %77 = vector.extract_strided_slice %71 {offsets = [16, 0], sizes = [2, 128], strides = [1, 1]} : vector<32x128xf32> to vector<2x128xf32>
    %78 = arith.addf %42, %77 : vector<2x128xf32>
    %c4_i32_22 = arith.constant 4 : i32
    %79 = tpu.dynamic_rotate %76 by %c4_i32_22 dim 1 : vector<16x128xf32>, i32 -> vector<16x128xf32>
    %cst_23 = arith.constant 0.000000e+00 : f32
    %80 = vector.broadcast %cst_23 : f32 to vector<16x128xf32>
    %81 = vector.shape_cast %22 : vector<1x128xi1> to vector<1x128xi1>
    %82 = vector.broadcast %81 : vector<1x128xi1> to vector<16x128xi1>
    %83 = arith.select %82, %79, %80 : vector<16x128xi1>, vector<16x128xf32>
    %c2_i32_24 = arith.constant 2 : i32
    %84 = tpu.dynamic_rotate %76 by %c2_i32_24 dim 1 : vector<16x128xf32>, i32 -> vector<16x128xf32>
    %cst_25 = arith.constant 0.000000e+00 : f32
    %85 = vector.broadcast %cst_25 : f32 to vector<16x128xf32>
    %86 = vector.shape_cast %20 : vector<1x128xi1> to vector<1x128xi1>
    %87 = vector.broadcast %86 : vector<1x128xi1> to vector<16x128xi1>
    %88 = arith.select %87, %84, %85 : vector<16x128xi1>, vector<16x128xf32>
    %89 = tpu.concatenate %83, %88, %76 in 0 : vector<16x128xf32>, vector<16x128xf32>, vector<16x128xf32> -> vector<48x128xf32>
    %90 = arith.truncf %89 : vector<48x128xf32> to vector<48x128xbf16>
    %c32_26 = arith.constant 32 : index
    %c0_27 = arith.constant 0 : index
    %91 = vector.load %arg2[%c32_26, %c0_27] : memref<384x48xbf16, #tpu.memory_space<vmem>>, vector<32x48xbf16>
    %cst_28 = arith.constant dense<0.000000e+00> : vector<32x128xf32>
    %92 = tpu.matmul %91, %90, %cst_28 {dimension_numbers = #tpu.dot_dimension_numbers<[1], [0], [0], [1], [0, 0, 1, 1], [], []>} : vector<32x48xbf16>, vector<48x128xbf16>, vector<32x128xf32> -> vector<32x128xf32>
    %c80 = arith.constant 80 : index
    %c0_29 = arith.constant 0 : index
    %93 = vector.load %arg3[%c80, %c0_29] : memref<338x1xf32, #tpu.memory_space<vmem>>, vector<32x1xf32>
    %94 = vector.broadcast %93 : vector<32x1xf32> to vector<32x128xf32>
    %95 = arith.addf %92, %94 : vector<32x128xf32>
    %96 = vector.extract_strided_slice %95 {offsets = [0, 0], sizes = [16, 128], strides = [1, 1]} : vector<32x128xf32> to vector<16x128xf32>
    %97 = math.tanh %96 : vector<16x128xf32>
    %98 = vector.extract_strided_slice %95 {offsets = [16, 0], sizes = [16, 128], strides = [1, 1]} : vector<32x128xf32> to vector<16x128xf32>
    %99 = arith.negf %98 : vector<16x128xf32>
    %100 = math.exp %99 : vector<16x128xf32>
    %cst_30 = arith.constant 1.000000e+00 : f32
    %101 = vector.broadcast %cst_30 : f32 to vector<16x128xf32>
    %102 = arith.addf %101, %100 : vector<16x128xf32>
    %103 = arith.divf %101, %102 : vector<16x128xf32>
    %104 = arith.mulf %97, %103 : vector<16x128xf32>
    %105 = arith.truncf %104 : vector<16x128xf32> to vector<16x128xbf16>
    %c224 = arith.constant 224 : index
    %c0_31 = arith.constant 0 : index
    %106 = vector.load %arg2[%c224, %c0_31] : memref<384x48xbf16, #tpu.memory_space<vmem>>, vector<32x16xbf16>
    %cst_32 = arith.constant dense<0.000000e+00> : vector<32x128xf32>
    %107 = tpu.matmul %106, %105, %cst_32 {dimension_numbers = #tpu.dot_dimension_numbers<[1], [0], [0], [1], [0, 0, 1, 1], [], []>} : vector<32x16xbf16>, vector<16x128xbf16>, vector<32x128xf32> -> vector<32x128xf32>
    %108 = vector.extract_strided_slice %107 {offsets = [0, 0], sizes = [16, 128], strides = [1, 1]} : vector<32x128xf32> to vector<16x128xf32>
    %c256 = arith.constant 256 : index
    %c0_33 = arith.constant 0 : index
    %109 = vector.load %arg3[%c256, %c0_33] : memref<338x1xf32, #tpu.memory_space<vmem>>, vector<16x1xf32>
    %110 = vector.broadcast %109 : vector<16x1xf32> to vector<16x128xf32>
    %111 = arith.addf %108, %110 : vector<16x128xf32>
    %112 = arith.addf %111, %76 : vector<16x128xf32>
    %113 = vector.extract_strided_slice %107 {offsets = [16, 0], sizes = [2, 128], strides = [1, 1]} : vector<32x128xf32> to vector<2x128xf32>
    %114 = arith.addf %78, %113 : vector<2x128xf32>
    %c8_i32_34 = arith.constant 8 : i32
    %115 = tpu.dynamic_rotate %112 by %c8_i32_34 dim 1 : vector<16x128xf32>, i32 -> vector<16x128xf32>
    %cst_35 = arith.constant 0.000000e+00 : f32
    %116 = vector.broadcast %cst_35 : f32 to vector<16x128xf32>
    %117 = vector.shape_cast %24 : vector<1x128xi1> to vector<1x128xi1>
    %118 = vector.broadcast %117 : vector<1x128xi1> to vector<16x128xi1>
    %119 = arith.select %118, %115, %116 : vector<16x128xi1>, vector<16x128xf32>
    %c4_i32_36 = arith.constant 4 : i32
    %120 = tpu.dynamic_rotate %112 by %c4_i32_36 dim 1 : vector<16x128xf32>, i32 -> vector<16x128xf32>
    %cst_37 = arith.constant 0.000000e+00 : f32
    %121 = vector.broadcast %cst_37 : f32 to vector<16x128xf32>
    %122 = vector.shape_cast %22 : vector<1x128xi1> to vector<1x128xi1>
    %123 = vector.broadcast %122 : vector<1x128xi1> to vector<16x128xi1>
    %124 = arith.select %123, %120, %121 : vector<16x128xi1>, vector<16x128xf32>
    %125 = tpu.concatenate %119, %124, %112 in 0 : vector<16x128xf32>, vector<16x128xf32>, vector<16x128xf32> -> vector<48x128xf32>
    %126 = arith.truncf %125 : vector<48x128xf32> to vector<48x128xbf16>
    %c64 = arith.constant 64 : index
    %c0_38 = arith.constant 0 : index
    %127 = vector.load %arg2[%c64, %c0_38] : memref<384x48xbf16, #tpu.memory_space<vmem>>, vector<32x48xbf16>
    %cst_39 = arith.constant dense<0.000000e+00> : vector<32x128xf32>
    %128 = tpu.matmul %127, %126, %cst_39 {dimension_numbers = #tpu.dot_dimension_numbers<[1], [0], [0], [1], [0, 0, 1, 1], [], []>} : vector<32x48xbf16>, vector<48x128xbf16>, vector<32x128xf32> -> vector<32x128xf32>
    %c112 = arith.constant 112 : index
    %c0_40 = arith.constant 0 : index
    %129 = vector.load %arg3[%c112, %c0_40] : memref<338x1xf32, #tpu.memory_space<vmem>>, vector<32x1xf32>
    %130 = vector.broadcast %129 : vector<32x1xf32> to vector<32x128xf32>
    %131 = arith.addf %128, %130 : vector<32x128xf32>
    %132 = vector.extract_strided_slice %131 {offsets = [0, 0], sizes = [16, 128], strides = [1, 1]} : vector<32x128xf32> to vector<16x128xf32>
    %133 = math.tanh %132 : vector<16x128xf32>
    %134 = vector.extract_strided_slice %131 {offsets = [16, 0], sizes = [16, 128], strides = [1, 1]} : vector<32x128xf32> to vector<16x128xf32>
    %135 = arith.negf %134 : vector<16x128xf32>
    %136 = math.exp %135 : vector<16x128xf32>
    %cst_41 = arith.constant 1.000000e+00 : f32
    %137 = vector.broadcast %cst_41 : f32 to vector<16x128xf32>
    %138 = arith.addf %137, %136 : vector<16x128xf32>
    %139 = arith.divf %137, %138 : vector<16x128xf32>
    %140 = arith.mulf %133, %139 : vector<16x128xf32>
    %141 = arith.truncf %140 : vector<16x128xf32> to vector<16x128xbf16>
    %c256_42 = arith.constant 256 : index
    %c0_43 = arith.constant 0 : index
    %142 = vector.load %arg2[%c256_42, %c0_43] : memref<384x48xbf16, #tpu.memory_space<vmem>>, vector<32x16xbf16>
    %cst_44 = arith.constant dense<0.000000e+00> : vector<32x128xf32>
    %143 = tpu.matmul %142, %141, %cst_44 {dimension_numbers = #tpu.dot_dimension_numbers<[1], [0], [0], [1], [0, 0, 1, 1], [], []>} : vector<32x16xbf16>, vector<16x128xbf16>, vector<32x128xf32> -> vector<32x128xf32>
    %144 = vector.extract_strided_slice %143 {offsets = [0, 0], sizes = [16, 128], strides = [1, 1]} : vector<32x128xf32> to vector<16x128xf32>
    %c272 = arith.constant 272 : index
    %c0_45 = arith.constant 0 : index
    %145 = vector.load %arg3[%c272, %c0_45] : memref<338x1xf32, #tpu.memory_space<vmem>>, vector<16x1xf32>
    %146 = vector.broadcast %145 : vector<16x1xf32> to vector<16x128xf32>
    %147 = arith.addf %144, %146 : vector<16x128xf32>
    %148 = arith.addf %147, %112 : vector<16x128xf32>
    %149 = vector.extract_strided_slice %143 {offsets = [16, 0], sizes = [2, 128], strides = [1, 1]} : vector<32x128xf32> to vector<2x128xf32>
    %150 = arith.addf %114, %149 : vector<2x128xf32>
    %c2_i32_46 = arith.constant 2 : i32
    %151 = tpu.dynamic_rotate %148 by %c2_i32_46 dim 1 : vector<16x128xf32>, i32 -> vector<16x128xf32>
    %cst_47 = arith.constant 0.000000e+00 : f32
    %152 = vector.broadcast %cst_47 : f32 to vector<16x128xf32>
    %153 = vector.shape_cast %20 : vector<1x128xi1> to vector<1x128xi1>
    %154 = vector.broadcast %153 : vector<1x128xi1> to vector<16x128xi1>
    %155 = arith.select %154, %151, %152 : vector<16x128xi1>, vector<16x128xf32>
    %c1_i32_48 = arith.constant 1 : i32
    %156 = tpu.dynamic_rotate %148 by %c1_i32_48 dim 1 : vector<16x128xf32>, i32 -> vector<16x128xf32>
    %cst_49 = arith.constant 0.000000e+00 : f32
    %157 = vector.broadcast %cst_49 : f32 to vector<16x128xf32>
    %158 = vector.shape_cast %18 : vector<1x128xi1> to vector<1x128xi1>
    %159 = vector.broadcast %158 : vector<1x128xi1> to vector<16x128xi1>
    %160 = arith.select %159, %156, %157 : vector<16x128xi1>, vector<16x128xf32>
    %161 = tpu.concatenate %155, %160, %148 in 0 : vector<16x128xf32>, vector<16x128xf32>, vector<16x128xf32> -> vector<48x128xf32>
    %162 = arith.truncf %161 : vector<48x128xf32> to vector<48x128xbf16>
    %c96 = arith.constant 96 : index
    %c0_50 = arith.constant 0 : index
    %163 = vector.load %arg2[%c96, %c0_50] : memref<384x48xbf16, #tpu.memory_space<vmem>>, vector<32x48xbf16>
    %cst_51 = arith.constant dense<0.000000e+00> : vector<32x128xf32>
    %164 = tpu.matmul %163, %162, %cst_51 {dimension_numbers = #tpu.dot_dimension_numbers<[1], [0], [0], [1], [0, 0, 1, 1], [], []>} : vector<32x48xbf16>, vector<48x128xbf16>, vector<32x128xf32> -> vector<32x128xf32>
    %c144 = arith.constant 144 : index
    %c0_52 = arith.constant 0 : index
    %165 = vector.load %arg3[%c144, %c0_52] : memref<338x1xf32, #tpu.memory_space<vmem>>, vector<32x1xf32>
    %166 = vector.broadcast %165 : vector<32x1xf32> to vector<32x128xf32>
    %167 = arith.addf %164, %166 : vector<32x128xf32>
    %168 = vector.extract_strided_slice %167 {offsets = [0, 0], sizes = [16, 128], strides = [1, 1]} : vector<32x128xf32> to vector<16x128xf32>
    %169 = math.tanh %168 : vector<16x128xf32>
    %170 = vector.extract_strided_slice %167 {offsets = [16, 0], sizes = [16, 128], strides = [1, 1]} : vector<32x128xf32> to vector<16x128xf32>
    %171 = arith.negf %170 : vector<16x128xf32>
    %172 = math.exp %171 : vector<16x128xf32>
    %cst_53 = arith.constant 1.000000e+00 : f32
    %173 = vector.broadcast %cst_53 : f32 to vector<16x128xf32>
    %174 = arith.addf %173, %172 : vector<16x128xf32>
    %175 = arith.divf %173, %174 : vector<16x128xf32>
    %176 = arith.mulf %169, %175 : vector<16x128xf32>
    %177 = arith.truncf %176 : vector<16x128xf32> to vector<16x128xbf16>
    %c288 = arith.constant 288 : index
    %c0_54 = arith.constant 0 : index
    %178 = vector.load %arg2[%c288, %c0_54] : memref<384x48xbf16, #tpu.memory_space<vmem>>, vector<32x16xbf16>
    %cst_55 = arith.constant dense<0.000000e+00> : vector<32x128xf32>
    %179 = tpu.matmul %178, %177, %cst_55 {dimension_numbers = #tpu.dot_dimension_numbers<[1], [0], [0], [1], [0, 0, 1, 1], [], []>} : vector<32x16xbf16>, vector<16x128xbf16>, vector<32x128xf32> -> vector<32x128xf32>
    %180 = vector.extract_strided_slice %179 {offsets = [0, 0], sizes = [16, 128], strides = [1, 1]} : vector<32x128xf32> to vector<16x128xf32>
    %c288_56 = arith.constant 288 : index
    %c0_57 = arith.constant 0 : index
    %181 = vector.load %arg3[%c288_56, %c0_57] : memref<338x1xf32, #tpu.memory_space<vmem>>, vector<16x1xf32>
    %182 = vector.broadcast %181 : vector<16x1xf32> to vector<16x128xf32>
    %183 = arith.addf %180, %182 : vector<16x128xf32>
    %184 = arith.addf %183, %148 : vector<16x128xf32>
    %185 = vector.extract_strided_slice %179 {offsets = [16, 0], sizes = [2, 128], strides = [1, 1]} : vector<32x128xf32> to vector<2x128xf32>
    %186 = arith.addf %150, %185 : vector<2x128xf32>
    %c4_i32_58 = arith.constant 4 : i32
    %187 = tpu.dynamic_rotate %184 by %c4_i32_58 dim 1 : vector<16x128xf32>, i32 -> vector<16x128xf32>
    %cst_59 = arith.constant 0.000000e+00 : f32
    %188 = vector.broadcast %cst_59 : f32 to vector<16x128xf32>
    %189 = vector.shape_cast %22 : vector<1x128xi1> to vector<1x128xi1>
    %190 = vector.broadcast %189 : vector<1x128xi1> to vector<16x128xi1>
    %191 = arith.select %190, %187, %188 : vector<16x128xi1>, vector<16x128xf32>
    %c2_i32_60 = arith.constant 2 : i32
    %192 = tpu.dynamic_rotate %184 by %c2_i32_60 dim 1 : vector<16x128xf32>, i32 -> vector<16x128xf32>
    %cst_61 = arith.constant 0.000000e+00 : f32
    %193 = vector.broadcast %cst_61 : f32 to vector<16x128xf32>
    %194 = vector.shape_cast %20 : vector<1x128xi1> to vector<1x128xi1>
    %195 = vector.broadcast %194 : vector<1x128xi1> to vector<16x128xi1>
    %196 = arith.select %195, %192, %193 : vector<16x128xi1>, vector<16x128xf32>
    %197 = tpu.concatenate %191, %196, %184 in 0 : vector<16x128xf32>, vector<16x128xf32>, vector<16x128xf32> -> vector<48x128xf32>
    %198 = arith.truncf %197 : vector<48x128xf32> to vector<48x128xbf16>
    %c128 = arith.constant 128 : index
    %c0_62 = arith.constant 0 : index
    %199 = vector.load %arg2[%c128, %c0_62] : memref<384x48xbf16, #tpu.memory_space<vmem>>, vector<32x48xbf16>
    %cst_63 = arith.constant dense<0.000000e+00> : vector<32x128xf32>
    %200 = tpu.matmul %199, %198, %cst_63 {dimension_numbers = #tpu.dot_dimension_numbers<[1], [0], [0], [1], [0, 0, 1, 1], [], []>} : vector<32x48xbf16>, vector<48x128xbf16>, vector<32x128xf32> -> vector<32x128xf32>
    %c176 = arith.constant 176 : index
    %c0_64 = arith.constant 0 : index
    %201 = vector.load %arg3[%c176, %c0_64] : memref<338x1xf32, #tpu.memory_space<vmem>>, vector<32x1xf32>
    %202 = vector.broadcast %201 : vector<32x1xf32> to vector<32x128xf32>
    %203 = arith.addf %200, %202 : vector<32x128xf32>
    %204 = vector.extract_strided_slice %203 {offsets = [0, 0], sizes = [16, 128], strides = [1, 1]} : vector<32x128xf32> to vector<16x128xf32>
    %205 = math.tanh %204 : vector<16x128xf32>
    %206 = vector.extract_strided_slice %203 {offsets = [16, 0], sizes = [16, 128], strides = [1, 1]} : vector<32x128xf32> to vector<16x128xf32>
    %207 = arith.negf %206 : vector<16x128xf32>
    %208 = math.exp %207 : vector<16x128xf32>
    %cst_65 = arith.constant 1.000000e+00 : f32
    %209 = vector.broadcast %cst_65 : f32 to vector<16x128xf32>
    %210 = arith.addf %209, %208 : vector<16x128xf32>
    %211 = arith.divf %209, %210 : vector<16x128xf32>
    %212 = arith.mulf %205, %211 : vector<16x128xf32>
    %213 = arith.truncf %212 : vector<16x128xf32> to vector<16x128xbf16>
    %c320 = arith.constant 320 : index
    %c0_66 = arith.constant 0 : index
    %214 = vector.load %arg2[%c320, %c0_66] : memref<384x48xbf16, #tpu.memory_space<vmem>>, vector<32x16xbf16>
    %cst_67 = arith.constant dense<0.000000e+00> : vector<32x128xf32>
    %215 = tpu.matmul %214, %213, %cst_67 {dimension_numbers = #tpu.dot_dimension_numbers<[1], [0], [0], [1], [0, 0, 1, 1], [], []>} : vector<32x16xbf16>, vector<16x128xbf16>, vector<32x128xf32> -> vector<32x128xf32>
    %216 = vector.extract_strided_slice %215 {offsets = [0, 0], sizes = [16, 128], strides = [1, 1]} : vector<32x128xf32> to vector<16x128xf32>
    %c304 = arith.constant 304 : index
    %c0_68 = arith.constant 0 : index
    %217 = vector.load %arg3[%c304, %c0_68] : memref<338x1xf32, #tpu.memory_space<vmem>>, vector<16x1xf32>
    %218 = vector.broadcast %217 : vector<16x1xf32> to vector<16x128xf32>
    %219 = arith.addf %216, %218 : vector<16x128xf32>
    %220 = arith.addf %219, %184 : vector<16x128xf32>
    %221 = vector.extract_strided_slice %215 {offsets = [16, 0], sizes = [2, 128], strides = [1, 1]} : vector<32x128xf32> to vector<2x128xf32>
    %222 = arith.addf %186, %221 : vector<2x128xf32>
    %c8_i32_69 = arith.constant 8 : i32
    %223 = tpu.dynamic_rotate %220 by %c8_i32_69 dim 1 : vector<16x128xf32>, i32 -> vector<16x128xf32>
    %cst_70 = arith.constant 0.000000e+00 : f32
    %224 = vector.broadcast %cst_70 : f32 to vector<16x128xf32>
    %225 = vector.shape_cast %24 : vector<1x128xi1> to vector<1x128xi1>
    %226 = vector.broadcast %225 : vector<1x128xi1> to vector<16x128xi1>
    %227 = arith.select %226, %223, %224 : vector<16x128xi1>, vector<16x128xf32>
    %c4_i32_71 = arith.constant 4 : i32
    %228 = tpu.dynamic_rotate %220 by %c4_i32_71 dim 1 : vector<16x128xf32>, i32 -> vector<16x128xf32>
    %cst_72 = arith.constant 0.000000e+00 : f32
    %229 = vector.broadcast %cst_72 : f32 to vector<16x128xf32>
    %230 = vector.shape_cast %22 : vector<1x128xi1> to vector<1x128xi1>
    %231 = vector.broadcast %230 : vector<1x128xi1> to vector<16x128xi1>
    %232 = arith.select %231, %228, %229 : vector<16x128xi1>, vector<16x128xf32>
    %233 = tpu.concatenate %227, %232, %220 in 0 : vector<16x128xf32>, vector<16x128xf32>, vector<16x128xf32> -> vector<48x128xf32>
    %234 = arith.truncf %233 : vector<48x128xf32> to vector<48x128xbf16>
    %c160 = arith.constant 160 : index
    %c0_73 = arith.constant 0 : index
    %235 = vector.load %arg2[%c160, %c0_73] : memref<384x48xbf16, #tpu.memory_space<vmem>>, vector<32x48xbf16>
    %cst_74 = arith.constant dense<0.000000e+00> : vector<32x128xf32>
    %236 = tpu.matmul %235, %234, %cst_74 {dimension_numbers = #tpu.dot_dimension_numbers<[1], [0], [0], [1], [0, 0, 1, 1], [], []>} : vector<32x48xbf16>, vector<48x128xbf16>, vector<32x128xf32> -> vector<32x128xf32>
    %c208 = arith.constant 208 : index
    %c0_75 = arith.constant 0 : index
    %237 = vector.load %arg3[%c208, %c0_75] : memref<338x1xf32, #tpu.memory_space<vmem>>, vector<32x1xf32>
    %238 = vector.broadcast %237 : vector<32x1xf32> to vector<32x128xf32>
    %239 = arith.addf %236, %238 : vector<32x128xf32>
    %240 = vector.extract_strided_slice %239 {offsets = [0, 0], sizes = [16, 128], strides = [1, 1]} : vector<32x128xf32> to vector<16x128xf32>
    %241 = math.tanh %240 : vector<16x128xf32>
    %242 = vector.extract_strided_slice %239 {offsets = [16, 0], sizes = [16, 128], strides = [1, 1]} : vector<32x128xf32> to vector<16x128xf32>
    %243 = arith.negf %242 : vector<16x128xf32>
    %244 = math.exp %243 : vector<16x128xf32>
    %cst_76 = arith.constant 1.000000e+00 : f32
    %245 = vector.broadcast %cst_76 : f32 to vector<16x128xf32>
    %246 = arith.addf %245, %244 : vector<16x128xf32>
    %247 = arith.divf %245, %246 : vector<16x128xf32>
    %248 = arith.mulf %241, %247 : vector<16x128xf32>
    %249 = arith.truncf %248 : vector<16x128xf32> to vector<16x128xbf16>
    %c352 = arith.constant 352 : index
    %c0_77 = arith.constant 0 : index
    %250 = vector.load %arg2[%c352, %c0_77] : memref<384x48xbf16, #tpu.memory_space<vmem>>, vector<32x16xbf16>
    %cst_78 = arith.constant dense<0.000000e+00> : vector<32x128xf32>
    %251 = tpu.matmul %250, %249, %cst_78 {dimension_numbers = #tpu.dot_dimension_numbers<[1], [0], [0], [1], [0, 0, 1, 1], [], []>} : vector<32x16xbf16>, vector<16x128xbf16>, vector<32x128xf32> -> vector<32x128xf32>
    %252 = vector.extract_strided_slice %251 {offsets = [16, 0], sizes = [2, 128], strides = [1, 1]} : vector<32x128xf32> to vector<2x128xf32>
    %253 = arith.addf %222, %252 : vector<2x128xf32>
    %c336 = arith.constant 336 : index
    %c0_79 = arith.constant 0 : index
    %254 = vector.load %arg3[%c336, %c0_79] : memref<338x1xf32, #tpu.memory_space<vmem>>, vector<2x1xf32>
    %255 = vector.broadcast %254 : vector<2x1xf32> to vector<2x128xf32>
    %256 = arith.addf %253, %255 : vector<2x128xf32>
    %c0_80 = arith.constant 0 : index
    %c0_81 = arith.constant 0 : index
    %257 = vector.load %arg4[%c0_80, %c0_81] : memref<2x128xf32, #tpu.memory_space<vmem>>, vector<2x128xf32>
    tpu.vector_store %arg4[%c0_80, %c0_81], %256 {strides = array<i32>} : memref<2x128xf32, #tpu.memory_space<vmem>>, vector<2x128xf32>,
    return
  }
  func.func @transform_0(%arg0: i32) -> (i32, i32) {
    %c0_i32 = arith.constant 0 : i32
    %c0_i32_0 = arith.constant 0 : i32
    return %c0_i32, %arg0 : i32, i32
  }
  func.func @transform_1(%arg0: i32) -> (i32, i32) {
    %c0_i32 = arith.constant 0 : i32
    %c0_i32_0 = arith.constant 0 : i32
    %c0_i32_1 = arith.constant 0 : i32
    return %c0_i32, %c0_i32_0 : i32, i32
  }
  func.func @transform_2(%arg0: i32) -> (i32, i32) {
    %c0_i32 = arith.constant 0 : i32
    %c0_i32_0 = arith.constant 0 : i32
    %c0_i32_1 = arith.constant 0 : i32
    return %c0_i32, %c0_i32_0 : i32, i32
  }
  func.func @transform_3(%arg0: i32) -> (i32, i32) {
    %c0_i32 = arith.constant 0 : i32
    %c0_i32_0 = arith.constant 0 : i32
    return %c0_i32, %arg0 : i32, i32
  }
}

</mosaic_0001>

<llo_original>
// kernel: wavenet_forward.1
$region0: #{wavenet_forward.1}
  #allocation0 [shape = 'u32[]', space=smem, size = 0x4, offset = 0x4, fixed_abs, tag = 'smem constant byte address 0x4 - core index']
  #allocation1 [shape = 'u32[144,128]{1,0:T(1,128)}', space=vmem, size = 0x12000, scoped, tag = 'internal scratch']
  %s0 = inlined_call_operand.vmem [shape: f32[2,256], index: 0, kind: input, shape index: {}]
  %s1 = inlined_call_operand.vmem [shape: bf16[384,48], index: 1, kind: input, shape index: {}]
  %s2 = inlined_call_operand.vmem [shape: f32[338,1], index: 2, kind: input, shape index: {}]
  %s3 = inlined_call_operand.hbm [shape: f32[2,256], index: 3, kind: output, shape index: {}]
  %s4 = sld [smem:[#allocation0]]
  $region45: #{wavenet_forward.1} parent=0
    _
  %s6 = ssub.s32 1, %s4
  %s7 = scalar_select 0, %s6, %s4
  $region1: #{wavenet_forward.1} parent=0
    #allocation2 [shape = 'u8[2048]{0}', space=vmem, size = 0x800, scoped, tag = 'output window, operand 0']
    #allocation3 [shape = 's32[2]{0}', space=sflag, size = 0x8, scoped, tag = 'scoped memory for wavenet_forward.1']
    %8 = vsyncpa [#allocation3], 0
    %s9 = scalar_lea.sflag [#allocation3], 1
    %10 = vsyncpa %s9, 0
    loop: start=0, step=1, limit=4
    $region2: #{wavenet_forward.1} parent=1 // loop_pre_header
      _
    $region3: #{wavenet_forward.1} parent=1 // loop_header
      %s12 = sphi 0, %s16
      %p13 = scmp.ge.s32.totalorder %s12, 4
      %s22 = sphi 0, %s24
      %s25 = sphi 0, %s22
      %s26 = sphi 0, %s25
      %s42 = sphi 0, %s26
      %s46 = sphi 0, %s46
      %s48 = sphi 0, %s46
      %s49 = sphi 0, %s48
      %s63 = sphi 0, %s49
      %s67 = sphi 0, %s67
      %s69 = sphi 0, %s67
      %s70 = sphi 0, %s69
      %s84 = sphi 0, %s70
      %s90 = sphi 0, %s92
      %s93 = sphi 0, %s90
      %s94 = sphi 0, %s93
      %s110 = sphi 0, %s94
    $region4: #{wavenet_forward.1} parent=1 // loop_header_branch
      %15 = sbr.rel (%p13) target = $region8
    $region5: #{wavenet_forward.1} parent=1 // loop_body
      %s17 = ssub.s32 %s12, 1
      %s18 = ssub.s32 %s12, 2
      %s19 = sadd.s32 %s12, 1
      %s20 = ssub.s32 %s12, %s19
      %p21 = scmp.eq.s32.totalorder %s20, 0
      %s23 = sadd.s32 %s22, 1
      %s24 = scalar_select %p21, %s22, %s23
      %p27 = pneg %p21
      %p28 = scmp.eq.s32.totalorder %s12, 1
      %p29 = por %p27, %p28
      %p30 = scmp.ne.s32.totalorder %s22, %s25
      %p31 = scmp.eq.s32.totalorder %s12, 0
      %p32 = por %p30, %p31
      %p33 = scmp.ne.s32.totalorder %s22, %s25
      %p34 = scmp.eq.s32.totalorder %s17, 1
      %p35 = por %p33, %p34
      %p36 = scmp.ne.s32.totalorder %s25, %s26
      %p37 = scmp.eq.s32.totalorder %s17, 0
      %p38 = por %p36, %p37
      %p39 = scmp.ne.s32.totalorder %s25, %s26
      %p40 = scmp.eq.s32.totalorder %s18, 1
      %p41 = por %p39, %p40
      %p43 = scmp.ne.s32.totalorder %s26, %s42
      %p44 = scmp.eq.s32.totalorder %s18, 0
      %p45 = por %p43, %p44
      %s47 = sadd.s32 %s46, 1
      %p50 = scmp.eq.s32.totalorder %s12, 1
      %p51 = scmp.ne.s32.totalorder %s46, %s48
      %p52 = scmp.eq.s32.totalorder %s12, 0
      %p53 = por %p51, %p52
      %p54 = scmp.ne.s32.totalorder %s46, %s48
      %p55 = scmp.eq.s32.totalorder %s17, 1
      %p56 = por %p54, %p55
      %p57 = scmp.ne.s32.totalorder %s48, %s49
      %p58 = scmp.eq.s32.totalorder %s17, 0
      %p59 = por %p57, %p58
      %p60 = scmp.ne.s32.totalorder %s48, %s49
      %p61 = scmp.eq.s32.totalorder %s18, 1
      %p62 = por %p60, %p61
      %p64 = scmp.ne.s32.totalorder %s49, %s63
      %p65 = scmp.eq.s32.totalorder %s18, 0
      %p66 = por %p64, %p65
      %s68 = sadd.s32 %s67, 1
      %p71 = scmp.eq.s32.totalorder %s12, 1
      %p72 = scmp.ne.s32.totalorder %s67, %s69
      %p73 = scmp.eq.s32.totalorder %s12, 0
      %p74 = por %p72, %p73
      %p75 = scmp.ne.s32.totalorder %s67, %s69
      %p76 = scmp.eq.s32.totalorder %s17, 1
      %p77 = por %p75, %p76
      %p78 = scmp.ne.s32.totalorder %s69, %s70
      %p79 = scmp.eq.s32.totalorder %s17, 0
      %p80 = por %p78, %p79
      %p81 = scmp.ne.s32.totalorder %s69, %s70
      %p82 = scmp.eq.s32.totalorder %s18, 1
      %p83 = por %p81, %p82
      %p85 = scmp.ne.s32.totalorder %s70, %s84
      %p86 = scmp.eq.s32.totalorder %s18, 0
      %p87 = por %p85, %p86
      %s88 = ssub.s32 %s12, %s19
      %p89 = scmp.eq.s32.totalorder %s88, 0
      %s91 = sadd.s32 %s90, 1
      %s92 = scalar_select %p89, %s90, %s91
      %p95 = pneg %p89
      %p96 = scmp.eq.s32.totalorder %s12, 1
      %p97 = por %p95, %p96
      %p98 = scmp.ne.s32.totalorder %s90, %s93
      %p99 = scmp.eq.s32.totalorder %s12, 0
      %p100 = por %p98, %p99
      %p101 = scmp.ne.s32.totalorder %s90, %s93
      %p102 = scmp.eq.s32.totalorder %s17, 1
      %p103 = por %p101, %p102
      %p104 = scmp.ne.s32.totalorder %s93, %s94
      %p105 = scmp.eq.s32.totalorder %s17, 0
      %p106 = por %p104, %p105
      %p107 = scmp.ne.s32.totalorder %s93, %s94
      %p108 = scmp.eq.s32.totalorder %s18, 1
      %p109 = por %p107, %p108
      %p111 = scmp.ne.s32.totalorder %s94, %s110
      %p112 = scmp.eq.s32.totalorder %s18, 0
      %p113 = por %p111, %p112
      %p114 = scmp.le.s32.totalorder 1, %s12
      %p115 = scmp.lt.s32.totalorder %s12, 3
      %p116 = pnand %p114, %p115
      %p117 = pneg %p116
      // Predicated region
      $region9: #{wavenet_forward.1} parent=5 // pred_check
        _
      $region10: #{wavenet_forward.1} parent=5 // pred_check_branch
        %119 = sbr.rel (%p116) target = $region12
      $region11: #{wavenet_forward.1} parent=5 // pred_region
        %s120 = ssub.s32 %s12, 1
        // Predicated region
        $region13: #{wavenet_forward.1} parent=11 // pred_check
          %p121 = pneg %p59
        $region14: #{wavenet_forward.1} parent=11 // pred_check_branch
          %123 = sbr.rel (%p121) target = $region16
        $region15: #{wavenet_forward.1} parent=11 // pred_region
          _
        $region16: #{wavenet_forward.1} parent=11 // pred_fallthru
          _
        // Predicated region
        $region17: #{wavenet_forward.1} parent=11 // pred_check
          %p124 = pneg %p80
        $region18: #{wavenet_forward.1} parent=11 // pred_check_branch
          %126 = sbr.rel (%p124) target = $region20
        $region19: #{wavenet_forward.1} parent=11 // pred_region
          _
        $region20: #{wavenet_forward.1} parent=11 // pred_fallthru
          _
      $region12: #{wavenet_forward.1} parent=5 // pred_fallthru
        _
      %p127 = scmp.lt.s32.totalorder %s12, 2
      // Predicated region
      $region21: #{wavenet_forward.1} parent=5 // pred_check
        %p128 = pneg %p127
      $region22: #{wavenet_forward.1} parent=5 // pred_check_branch
        %130 = sbr.rel (%p128) target = $region24
      $region23: #{wavenet_forward.1} parent=5 // pred_region
        // Predicated region
        $region25: #{wavenet_forward.1} parent=23 // pred_check
          %p131 = pneg %p32
        $region26: #{wavenet_forward.1} parent=23 // pred_check_branch
          %133 = sbr.rel (%p131) target = $region28
        $region27: #{wavenet_forward.1} parent=23 // pred_region
          %p134 = scmp.lt.s32.totalorder %s12, 1
          %s135 = scalar_select %p134, %s12, 1
          %s136 = smul.addr %s135, 2
          %s137 = scalar_lea.vmem %s0, %s136
        $region28: #{wavenet_forward.1} parent=23 // pred_fallthru
          _
      $region24: #{wavenet_forward.1} parent=5 // pred_fallthru
        _
      %p138 = scmp.le.s32.totalorder 1, %s12
      %p139 = scmp.lt.s32.totalorder %s12, 3
      %p140 = pnand %p138, %p139
      %p141 = pneg %p140
      // Predicated region
      $region29: #{wavenet_forward.1} parent=5 // pred_check
        _
      $region30: #{wavenet_forward.1} parent=5 // pred_check_branch
        %143 = sbr.rel (%p140) target = $region32
      $region31: #{wavenet_forward.1} parent=5 // pred_region
        %s144 = ssub.s32 %s12, 1
        %p145 = scmp.lt.s32.totalorder %s17, 1
        %s146 = scalar_select %p145, %s17, 1
        %s147 = smul.addr %s146, 2
        %s148 = scalar_lea.vmem %s0, %s147
        %p149 = pneg %p38
        %p150 = pneg %p35
        %p151 = pneg %p59
        %p152 = pneg %p56
        %p153 = pneg %p80
        %p154 = pneg %p77
        %p155 = pneg %p106
        %p156 = pneg %p103
        %s157 = sand.u32 %s93, 1
        %s158 = scalar_lea.sflag [#allocation3], %s157
        %s159 = sand.u32 %s93, 1
        %s160 = smul.addr %s159, 2
        %s161 = scalar_lea.vmem [#allocation2], %s160
        %p162 = scmp.lt.s32.totalorder %s17, 1
        %s163 = scalar_select %p162, %s17, 1
        %s164 = smul.addr %s163, 2
        %s165 = scalar_lea.vmem %s0, %s164
        %v167 = vlaneseq
        %v168 = vand.u32 %v167, 127
        %vm169 = vcmp.lt.s32.totalorder %v168, 0
        %v170 = vsub.s32 0, %v168
        %v171 = vsel %vm169, %v170, %v168
        %v172 = vshrl.u32 %v171, 7
        %v173 = vand.u32 %v171, 127
        %v174 = vsub.s32 0, %v173
        %v175 = vsel %vm169, %v174, %v173
        %vm176 = vcmp.ne.s32.totalorder %v175, 0
        %vm177 = vcmp.lt.s32.totalorder %v175, 0
        %vm178 = vmand %vm177, %vm176
        %v179 = vadd.s32 %v175, 128
        %v180 = vsel %vm178, %v179, %v175
        %vm181 = vcmp.ge.s32.totalorder %v180, 1
        %vm182 = vcmp.ge.s32.totalorder %v180, 2
        %vm183 = vcmp.ge.s32.totalorder %v180, 4
        %vm184 = vcmp.ge.s32.totalorder %v180, 8
        %v185 = vld [vmem:[%s165] sm:$0x3]
        %v186 = vld [vmem:[%s2 + $0x20] sm:$0xff]
        %v187 = vld [vmem:[%s2 + $0x28] sm:$0xff]
        %189 = vset.pattern.permute.xlu0 0
        %190 = vperm.xlu0 %189, %v186
        %v191 = vpop.permute.xlu0 %190
        %194 = vset.pattern.permute.xlu0 0
        %195 = vperm.xlu0 %194, %v187
        %v196 = vpop.permute.xlu0 %195
        %v198 = vadd.f32 %v191, 0.0
        %v199 = vadd.f32 %v196, 0.0
        %v200 = vld [vmem:[%s2] sm:$0xff]
        %v201 = vld [vmem:[%s2 + $0x8] sm:$0xff]
        %203 = vset.pattern.permute.xlu0 0
        %204 = vperm.xlu0 %203, %v200
        %v205 = vpop.permute.xlu0 %204
        %208 = vset.pattern.permute.xlu0 0
        %209 = vperm.xlu0 %208, %v201
        %v210 = vpop.permute.xlu0 %209
        %v212 = vlaneseq
        %v213 = vshrl.u32 %v212, 7
        %v214 = vsub.s32 0, %v213
        %v215 = vrot.slane %v185, %v214
        %v216 = vmul.f32 %v205, %v215
        %v217 = vmul.f32 %v210, %v215
        %v218 = vadd.f32 %v198, %v216
        %v219 = vadd.f32 %v199, %v217
        %v220 = vld [vmem:[%s2 + $0x10] sm:$0xff]
        %v221 = vld [vmem:[%s2 + $0x18] sm:$0xff]
        %223 = vset.pattern.permute.xlu0 0
        %224 = vperm.xlu0 %223, %v220
        %v225 = vpop.permute.xlu0 %224
        %228 = vset.pattern.permute.xlu0 0
        %229 = vperm.xlu0 %228, %v221
        %v230 = vpop.permute.xlu0 %229
        %v232 = vlaneseq
        %v233 = vshrl.u32 %v232, 7
        %v234 = vsub.s32 1, %v233
        %v235 = vrot.slane %v185, %v234
        %v236 = vmul.f32 %v225, %v235
        %v237 = vmul.f32 %v230, %v235
        %v238 = vadd.f32 %v218, %v236
        %v239 = vadd.f32 %v219, %v237
        %240 = vrot.lane.b32.xlu0 %v238, 2
        %v241 = vpop.permute.xlu0 %240
        %242 = vrot.lane.b32.xlu0 %v239, 2
        %v243 = vpop.permute.xlu0 %242
        %v244 = vsel %vm182, 1, 0
        %vm245 = vcmp.eq.s32.totalorder %v244, 1
        %v246 = vsel %vm245, %v241, 0.0
        %v247 = vsel %vm245, %v243, 0.0
        %248 = vrot.lane.b32.xlu0 %v238, 1
        %v249 = vpop.permute.xlu0 %248
        %250 = vrot.lane.b32.xlu0 %v239, 1
        %v251 = vpop.permute.xlu0 %250
        %v252 = vsel %vm181, 1, 0
        %vm253 = vcmp.eq.s32.totalorder %v252, 1
        %v254 = vsel %vm253, %v249, 0.0
        %v255 = vsel %vm253, %v251, 0.0
        %v256 = vpack.c.bf16 %v247, %v246
        %v257 = vpack.c.bf16 %v255, %v254
        %v258 = vpack.c.bf16 %v239, %v238
        %v259 = vld [vmem:[%s1] sm:$0xf]
        %v260 = vld [vmem:[%s1 + $0x4] sm:$0xf]
        %v261 = vld [vmem:[%s1 + $0x8] sm:$0xf]
        %v262 = vld [vmem:[%s1 + $0xc] sm:$0xf]
        %v263 = vld [vmem:[%s2 + $0x30] sm:$0xff]
        %v264 = vld [vmem:[%s2 + $0x38] sm:$0xff]
        %v265 = vld [vmem:[%s2 + $0x40] sm:$0xff]
        %v266 = vld [vmem:[%s2 + $0x48] sm:$0xff]
        %268 = vset.pattern.permute.xlu0 0
        %269 = vperm.xlu0 %268, %v263
        %v270 = vpop.permute.xlu0 %269
        %273 = vset.pattern.permute.xlu0 0
        %274 = vperm.xlu0 %273, %v264
        %v275 = vpop.permute.xlu0 %274
        %278 = vset.pattern.permute.xlu0 0
        %279 = vperm.xlu0 %278, %v265
        %v280 = vpop.permute.xlu0 %279
        %283 = vset.pattern.permute.xlu0 0
        %284 = vperm.xlu0 %283, %v266
        %v285 = vpop.permute.xlu0 %284
        %v291 = vunpack.c.l.b16 %v259
        %v292 = vunpack.c.l.b16 %v260
        %v293 = vunpack.c.l.b16 %v261
        %v294 = vunpack.c.l.b16 %v262
        %v295 = vpack.c.b16 %v292, %v291
        %v296 = vpack.c.b16 %v294, %v293
        %vm297 = vcmask 392192
        %v299 = vsel %vm297, %v295, 0
        %v302 = vsel %vm297, %v296, 0
        %304 = vmatprep.subr.bf16.mxu0 0
        %305 = vmatpush1.bf16.msra.mxu0 %v256
        %306 = vmatprep.subr.bf16.mxu0 0
        %307 = vmatpush1.bf16.msra.mxu0 %v257
        %308 = vmatprep.subr.bf16.mxu0 0
        %309 = vmatpush1.bf16.msra.mxu0 %v258
        %310 = vmatprep.subr.bf16.mxu0 0
        %311 = vmatpush1.bf16.msra.mxu0 0
        %312 = vmatprep.subr.bf16.mxu0 0
        %313 = vmatpush1.bf16.msra.mxu0 0
        %314 = vmatprep.subr.bf16.mxu0 0
        %315 = vmatpush1.bf16.msra.mxu0 0
        %316 = vmatprep.subr.bf16.mxu0 0
        %317 = vmatpush1.bf16.msra.mxu0 0
        %318 = vmatprep.subr.bf16.mxu0 0
        %319 = vmatpush1.bf16.msra.mxu0 0
        %320 = vmatprep.subr.bf16.mxu0 0
        %321 = vmatpush1.bf16.msra.mxu0 0
        %322 = vmatprep.subr.bf16.mxu0 0
        %323 = vmatpush1.bf16.msra.mxu0 0
        %324 = vmatprep.subr.bf16.mxu0 0
        %325 = vmatpush1.bf16.msra.mxu0 0
        %326 = vmatprep.subr.bf16.mxu0 0
        %327 = vmatpush1.bf16.msra.mxu0 0
        %328 = vmatprep.subr.bf16.mxu0 0
        %329 = vmatpush1.bf16.msra.mxu0 0
        %330 = vmatprep.subr.bf16.mxu0 0
        %331 = vmatpush1.bf16.msra.mxu0 0
        %332 = vmatprep.subr.bf16.mxu0 0
        %333 = vmatpush1.bf16.msra.mxu0 0
        %334 = vmatprep.subr.bf16.mxu0 0
        %335 = vmatpush1.bf16.msra.mxu0 0
        %336 = vmatprep.mubr.bf16.mxu0 0
        %337 = vmatmul.mubr.bf16.gmra.mrb[0].mxu0 %v299
        %v338 = vpop.f32.mrb[0].mxu0
        %v339 = vadd.f32 %v270, %v338
        %v340 = vpop.f32.mrb[0].mxu0
        %v341 = vpop.f32.mrb[0].mxu0
        %v342 = vadd.f32 %v275, %v341
        %v343 = vpop.f32.mrb[0].mxu0
        %344 = vmatprep.mubr.bf16.mxu0 0
        %345 = vmatmul.mubr.bf16.gmra.mrb[0].mxu0 %v302
        %v346 = vpop.f32.mrb[0].mxu0
        %v347 = vadd.f32 %v280, %v346
        %v348 = vpop.f32.mrb[0].mxu0
        %v349 = vpop.f32.mrb[0].mxu0
        %v350 = vadd.f32 %v285, %v349
        %v351 = vpop.f32.mrb[0].mxu0
        %352 = vdwg.mxu0
        %v353 = vtanh.pop %v339
        %v354 = vtanh.pop %v342
        %v355 = vxor.u32 %v347, 2147483648
        %v356 = vxor.u32 %v350, 2147483648
        %v357 = vmul.f32 %v355, 1.442695
        %v358 = vpow.pop %v357
        %v359 = vmul.f32 %v356, 1.442695
        %v360 = vpow.pop %v359
        %v361 = vadd.f32 %v358, 1.0
        %v362 = vadd.f32 %v360, 1.0
        %v363 = vrcp.pop %v361
        %v364 = vmul.f32 1.0, %v363
        %v365 = vrcp.pop %v362
        %v366 = vmul.f32 1.0, %v365
        %v367 = vmul.f32 %v353, %v364
        %v368 = vmul.f32 %v354, %v366
        %v369 = vpack.c.bf16 %v368, %v367
        %v370 = vld [vmem:[%s1 + $0x60] sm:$0xf]
        %v371 = vld [vmem:[%s1 + $0x64] sm:$0xf]
        %v372 = vld [vmem:[%s1 + $0x68] sm:$0xf]
        %v373 = vld [vmem:[%s1 + $0x6c] sm:$0xf]
        %v378 = vunpack.c.l.b16 %v370
        %v379 = vunpack.c.l.b16 %v371
        %v380 = vunpack.c.l.b16 %v372
        %v381 = vunpack.c.l.b16 %v373
        %v382 = vpack.c.b16 %v379, %v378
        %v383 = vpack.c.b16 %v381, %v380
        %vm384 = vcmask 130048
        %v386 = vsel %vm384, %v382, 0
        %v389 = vsel %vm384, %v383, 0
        %391 = vmatprep.subr.bf16.mxu0 0
        %392 = vmatpush1.bf16.msra.mxu0 %v369
        %393 = vmatprep.subr.bf16.mxu0 0
        %394 = vmatpush1.bf16.msra.mxu0 0
        %395 = vmatprep.subr.bf16.mxu0 0
        %396 = vmatpush1.bf16.msra.mxu0 0
        %397 = vmatprep.subr.bf16.mxu0 0
        %398 = vmatpush1.bf16.msra.mxu0 0
        %399 = vmatprep.subr.bf16.mxu0 0
        %400 = vmatpush1.bf16.msra.mxu0 0
        %401 = vmatprep.subr.bf16.mxu0 0
        %402 = vmatpush1.bf16.msra.mxu0 0
        %403 = vmatprep.subr.bf16.mxu0 0
        %404 = vmatpush1.bf16.msra.mxu0 0
        %405 = vmatprep.subr.bf16.mxu0 0
        %406 = vmatpush1.bf16.msra.mxu0 0
        %407 = vmatprep.subr.bf16.mxu0 0
        %408 = vmatpush1.bf16.msra.mxu0 0
        %409 = vmatprep.subr.bf16.mxu0 0
        %410 = vmatpush1.bf16.msra.mxu0 0
        %411 = vmatprep.subr.bf16.mxu0 0
        %412 = vmatpush1.bf16.msra.mxu0 0
        %413 = vmatprep.subr.bf16.mxu0 0
        %414 = vmatpush1.bf16.msra.mxu0 0
        %415 = vmatprep.subr.bf16.mxu0 0
        %416 = vmatpush1.bf16.msra.mxu0 0
        %417 = vmatprep.subr.bf16.mxu0 0
        %418 = vmatpush1.bf16.msra.mxu0 0
        %419 = vmatprep.subr.bf16.mxu0 0
        %420 = vmatpush1.bf16.msra.mxu0 0
        %421 = vmatprep.subr.bf16.mxu0 0
        %422 = vmatpush1.bf16.msra.mxu0 0
        %423 = vmatprep.mubr.bf16.mxu0 0
        %424 = vmatmul.mubr.bf16.gmra.mrb[0].mxu0 %v386
        %v425 = vpop.f32.mrb[0].mxu0
        %v426 = vadd.f32 0.0, %v425
        %v427 = vpop.f32.mrb[0].mxu0
        %v428 = vpop.f32.mrb[0].mxu0
        %v429 = vadd.f32 0.0, %v428
        %v430 = vpop.f32.mrb[0].mxu0
        %431 = vmatprep.mubr.bf16.mxu0 0
        %432 = vmatmul.mubr.bf16.gmra.mrb[0].mxu0 %v389
        %v433 = vpop.f32.mrb[0].mxu0
        %v434 = vadd.f32 0.0, %v433
        %v435 = vpop.f32.mrb[0].mxu0
        %v436 = vpop.f32.mrb[0].mxu0
        %v437 = vpop.f32.mrb[0].mxu0
        %438 = vdwg.mxu0
        %v439 = vld [vmem:[%s2 + $0xf0] sm:$0xff]
        %v440 = vld [vmem:[%s2 + $0xf8] sm:$0xff]
        %442 = vset.pattern.permute.xlu0 0
        %443 = vperm.xlu0 %442, %v439
        %v444 = vpop.permute.xlu0 %443
        %447 = vset.pattern.permute.xlu0 0
        %448 = vperm.xlu0 %447, %v440
        %v449 = vpop.permute.xlu0 %448
        %v451 = vadd.f32 %v426, %v444
        %v452 = vadd.f32 %v429, %v449
        %v453 = vadd.f32 %v451, %v238
        %v454 = vadd.f32 %v452, %v239
        %v455 = vadd.f32 %v434, 0.0
        %456 = vrot.lane.b32.xlu0 %v453, 4
        %v457 = vpop.permute.xlu0 %456
        %458 = vrot.lane.b32.xlu0 %v454, 4
        %v459 = vpop.permute.xlu0 %458
        %v460 = vsel %vm183, 1, 0
        %vm461 = vcmp.eq.s32.totalorder %v460, 1
        %v462 = vsel %vm461, %v457, 0.0
        %v463 = vsel %vm461, %v459, 0.0
        %464 = vrot.lane.b32.xlu0 %v453, 2
        %v465 = vpop.permute.xlu0 %464
        %466 = vrot.lane.b32.xlu0 %v454, 2
        %v467 = vpop.permute.xlu0 %466
        %v468 = vsel %vm245, %v465, 0.0
        %v469 = vsel %vm245, %v467, 0.0
        %v470 = vpack.c.bf16 %v463, %v462
        %v471 = vpack.c.bf16 %v469, %v468
        %v472 = vpack.c.bf16 %v454, %v453
        %v473 = vld [vmem:[%s1 + $0x10] sm:$0xf]
        %v474 = vld [vmem:[%s1 + $0x14] sm:$0xf]
        %v475 = vld [vmem:[%s1 + $0x18] sm:$0xf]
        %v476 = vld [vmem:[%s1 + $0x1c] sm:$0xf]
        %v477 = vld [vmem:[%s2 + $0x50] sm:$0xff]
        %v478 = vld [vmem:[%s2 + $0x58] sm:$0xff]
        %v479 = vld [vmem:[%s2 + $0x60] sm:$0xff]
        %v480 = vld [vmem:[%s2 + $0x68] sm:$0xff]
        %482 = vset.pattern.permute.xlu0 0
        %483 = vperm.xlu0 %482, %v477
        %v484 = vpop.permute.xlu0 %483
        %487 = vset.pattern.permute.xlu0 0
        %488 = vperm.xlu0 %487, %v478
        %v489 = vpop.permute.xlu0 %488
        %492 = vset.pattern.permute.xlu0 0
        %493 = vperm.xlu0 %492, %v479
        %v494 = vpop.permute.xlu0 %493
        %497 = vset.pattern.permute.xlu0 0
        %498 = vperm.xlu0 %497, %v480
        %v499 = vpop.permute.xlu0 %498
        %v505 = vunpack.c.l.b16 %v473
        %v506 = vunpack.c.l.b16 %v474
        %v507 = vunpack.c.l.b16 %v475
        %v508 = vunpack.c.l.b16 %v476
        %v509 = vpack.c.b16 %v506, %v505
        %v510 = vpack.c.b16 %v508, %v507
        %v512 = vsel %vm297, %v509, 0
        %v515 = vsel %vm297, %v510, 0
        %517 = vmatprep.subr.bf16.mxu0 0
        %518 = vmatpush1.bf16.msra.mxu0 %v470
        %519 = vmatprep.subr.bf16.mxu0 0
        %520 = vmatpush1.bf16.msra.mxu0 %v471
        %521 = vmatprep.subr.bf16.mxu0 0
        %522 = vmatpush1.bf16.msra.mxu0 %v472
        %523 = vmatprep.subr.bf16.mxu0 0
        %524 = vmatpush1.bf16.msra.mxu0 0
        %525 = vmatprep.subr.bf16.mxu0 0
        %526 = vmatpush1.bf16.msra.mxu0 0
        %527 = vmatprep.subr.bf16.mxu0 0
        %528 = vmatpush1.bf16.msra.mxu0 0
        %529 = vmatprep.subr.bf16.mxu0 0
        %530 = vmatpush1.bf16.msra.mxu0 0
        %531 = vmatprep.subr.bf16.mxu0 0
        %532 = vmatpush1.bf16.msra.mxu0 0
        %533 = vmatprep.subr.bf16.mxu0 0
        %534 = vmatpush1.bf16.msra.mxu0 0
        %535 = vmatprep.subr.bf16.mxu0 0
        %536 = vmatpush1.bf16.msra.mxu0 0
        %537 = vmatprep.subr.bf16.mxu0 0
        %538 = vmatpush1.bf16.msra.mxu0 0
        %539 = vmatprep.subr.bf16.mxu0 0
        %540 = vmatpush1.bf16.msra.mxu0 0
        %541 = vmatprep.subr.bf16.mxu0 0
        %542 = vmatpush1.bf16.msra.mxu0 0
        %543 = vmatprep.subr.bf16.mxu0 0
        %544 = vmatpush1.bf16.msra.mxu0 0
        %545 = vmatprep.subr.bf16.mxu0 0
        %546 = vmatpush1.bf16.msra.mxu0 0
        %547 = vmatprep.subr.bf16.mxu0 0
        %548 = vmatpush1.bf16.msra.mxu0 0
        %549 = vmatprep.mubr.bf16.mxu0 0
        %550 = vmatmul.mubr.bf16.gmra.mrb[0].mxu0 %v512
        %v551 = vpop.f32.mrb[0].mxu0
        %v552 = vadd.f32 %v484, %v551
        %v553 = vpop.f32.mrb[0].mxu0
        %v554 = vpop.f32.mrb[0].mxu0
        %v555 = vadd.f32 %v489, %v554
        %v556 = vpop.f32.mrb[0].mxu0
        %557 = vmatprep.mubr.bf16.mxu0 0
        %558 = vmatmul.mubr.bf16.gmra.mrb[0].mxu0 %v515
        %v559 = vpop.f32.mrb[0].mxu0
        %v560 = vadd.f32 %v494, %v559
        %v561 = vpop.f32.mrb[0].mxu0
        %v562 = vpop.f32.mrb[0].mxu0
        %v563 = vadd.f32 %v499, %v562
        %v564 = vpop.f32.mrb[0].mxu0
        %565 = vdwg.mxu0
        %v566 = vtanh.pop %v552
        %v567 = vtanh.pop %v555
        %v568 = vxor.u32 %v560, 2147483648
        %v569 = vxor.u32 %v563, 2147483648
        %v570 = vmul.f32 %v568, 1.442695
        %v571 = vpow.pop %v570
        %v572 = vmul.f32 %v569, 1.442695
        %v573 = vpow.pop %v572
        %v574 = vadd.f32 %v571, 1.0
        %v575 = vadd.f32 %v573, 1.0
        %v576 = vrcp.pop %v574
        %v577 = vmul.f32 1.0, %v576
        %v578 = vrcp.pop %v575
        %v579 = vmul.f32 1.0, %v578
        %v580 = vmul.f32 %v566, %v577
        %v581 = vmul.f32 %v567, %v579
        %v582 = vpack.c.bf16 %v581, %v580
        %v583 = vld [vmem:[%s1 + $0x70] sm:$0xf]
        %v584 = vld [vmem:[%s1 + $0x74] sm:$0xf]
        %v585 = vld [vmem:[%s1 + $0x78] sm:$0xf]
        %v586 = vld [vmem:[%s1 + $0x7c] sm:$0xf]
        %v591 = vunpack.c.l.b16 %v583
        %v592 = vunpack.c.l.b16 %v584
        %v593 = vunpack.c.l.b16 %v585
        %v594 = vunpack.c.l.b16 %v586
        %v595 = vpack.c.b16 %v592, %v591
        %v596 = vpack.c.b16 %v594, %v593
        %v598 = vsel %vm384, %v595, 0
        %v601 = vsel %vm384, %v596, 0
        %603 = vmatprep.subr.bf16.mxu0 0
        %604 = vmatpush1.bf16.msra.mxu0 %v582
        %605 = vmatprep.subr.bf16.mxu0 0
        %606 = vmatpush1.bf16.msra.mxu0 0
        %607 = vmatprep.subr.bf16.mxu0 0
        %608 = vmatpush1.bf16.msra.mxu0 0
        %609 = vmatprep.subr.bf16.mxu0 0
        %610 = vmatpush1.bf16.msra.mxu0 0
        %611 = vmatprep.subr.bf16.mxu0 0
        %612 = vmatpush1.bf16.msra.mxu0 0
        %613 = vmatprep.subr.bf16.mxu0 0
        %614 = vmatpush1.bf16.msra.mxu0 0
        %615 = vmatprep.subr.bf16.mxu0 0
        %616 = vmatpush1.bf16.msra.mxu0 0
        %617 = vmatprep.subr.bf16.mxu0 0
        %618 = vmatpush1.bf16.msra.mxu0 0
        %619 = vmatprep.subr.bf16.mxu0 0
        %620 = vmatpush1.bf16.msra.mxu0 0
        %621 = vmatprep.subr.bf16.mxu0 0
        %622 = vmatpush1.bf16.msra.mxu0 0
        %623 = vmatprep.subr.bf16.mxu0 0
        %624 = vmatpush1.bf16.msra.mxu0 0
        %625 = vmatprep.subr.bf16.mxu0 0
        %626 = vmatpush1.bf16.msra.mxu0 0
        %627 = vmatprep.subr.bf16.mxu0 0
        %628 = vmatpush1.bf16.msra.mxu0 0
        %629 = vmatprep.subr.bf16.mxu0 0
        %630 = vmatpush1.bf16.msra.mxu0 0
        %631 = vmatprep.subr.bf16.mxu0 0
        %632 = vmatpush1.bf16.msra.mxu0 0
        %633 = vmatprep.subr.bf16.mxu0 0
        %634 = vmatpush1.bf16.msra.mxu0 0
        %635 = vmatprep.mubr.bf16.mxu0 0
        %636 = vmatmul.mubr.bf16.gmra.mrb[0].mxu0 %v598
        %v637 = vpop.f32.mrb[0].mxu0
        %v638 = vadd.f32 0.0, %v637
        %v639 = vpop.f32.mrb[0].mxu0
        %v640 = vpop.f32.mrb[0].mxu0
        %v641 = vadd.f32 0.0, %v640
        %v642 = vpop.f32.mrb[0].mxu0
        %643 = vmatprep.mubr.bf16.mxu0 0
        %644 = vmatmul.mubr.bf16.gmra.mrb[0].mxu0 %v601
        %v645 = vpop.f32.mrb[0].mxu0
        %v646 = vadd.f32 0.0, %v645
        %v647 = vpop.f32.mrb[0].mxu0
        %v648 = vpop.f32.mrb[0].mxu0
        %v649 = vpop.f32.mrb[0].mxu0
        %650 = vdwg.mxu0
        %v651 = vld [vmem:[%s2 + $0x100] sm:$0xff]
        %v652 = vld [vmem:[%s2 + $0x108] sm:$0xff]
        %654 = vset.pattern.permute.xlu0 0
        %655 = vperm.xlu0 %654, %v651
        %v656 = vpop.permute.xlu0 %655
        %659 = vset.pattern.permute.xlu0 0
        %660 = vperm.xlu0 %659, %v652
        %v661 = vpop.permute.xlu0 %660
        %v663 = vadd.f32 %v638, %v656
        %v664 = vadd.f32 %v641, %v661
        %v665 = vadd.f32 %v663, %v453
        %v666 = vadd.f32 %v664, %v454
        %v667 = vadd.f32 %v455, %v646
        %668 = vrot.lane.b32.xlu0 %v665, 8
        %v669 = vpop.permute.xlu0 %668
        %670 = vrot.lane.b32.xlu0 %v666, 8
        %v671 = vpop.permute.xlu0 %670
        %v672 = vsel %vm184, 1, 0
        %vm673 = vcmp.eq.s32.totalorder %v672, 1
        %v674 = vsel %vm673, %v669, 0.0
        %v675 = vsel %vm673, %v671, 0.0
        %676 = vrot.lane.b32.xlu0 %v665, 4
        %v677 = vpop.permute.xlu0 %676
        %678 = vrot.lane.b32.xlu0 %v666, 4
        %v679 = vpop.permute.xlu0 %678
        %v680 = vsel %vm461, %v677, 0.0
        %v681 = vsel %vm461, %v679, 0.0
        %v682 = vpack.c.bf16 %v675, %v674
        %v683 = vpack.c.bf16 %v681, %v680
        %v684 = vpack.c.bf16 %v666, %v665
        %v685 = vld [vmem:[%s1 + $0x20] sm:$0xf]
        %v686 = vld [vmem:[%s1 + $0x24] sm:$0xf]
        %v687 = vld [vmem:[%s1 + $0x28] sm:$0xf]
        %v688 = vld [vmem:[%s1 + $0x2c] sm:$0xf]
        %v689 = vld [vmem:[%s2 + $0x70] sm:$0xff]
        %v690 = vld [vmem:[%s2 + $0x78] sm:$0xff]
        %v691 = vld [vmem:[%s2 + $0x80] sm:$0xff]
        %v692 = vld [vmem:[%s2 + $0x88] sm:$0xff]
        %694 = vset.pattern.permute.xlu0 0
        %695 = vperm.xlu0 %694, %v689
        %v696 = vpop.permute.xlu0 %695
        %699 = vset.pattern.permute.xlu0 0
        %700 = vperm.xlu0 %699, %v690
        %v701 = vpop.permute.xlu0 %700
        %704 = vset.pattern.permute.xlu0 0
        %705 = vperm.xlu0 %704, %v691
        %v706 = vpop.permute.xlu0 %705
        %709 = vset.pattern.permute.xlu0 0
        %710 = vperm.xlu0 %709, %v692
        %v711 = vpop.permute.xlu0 %710
        %v717 = vunpack.c.l.b16 %v685
        %v718 = vunpack.c.l.b16 %v686
        %v719 = vunpack.c.l.b16 %v687
        %v720 = vunpack.c.l.b16 %v688
        %v721 = vpack.c.b16 %v718, %v717
        %v722 = vpack.c.b16 %v720, %v719
        %v724 = vsel %vm297, %v721, 0
        %v727 = vsel %vm297, %v722, 0
        %729 = vmatprep.subr.bf16.mxu0 0
        %730 = vmatpush1.bf16.msra.mxu0 %v682
        %731 = vmatprep.subr.bf16.mxu0 0
        %732 = vmatpush1.bf16.msra.mxu0 %v683
        %733 = vmatprep.subr.bf16.mxu0 0
        %734 = vmatpush1.bf16.msra.mxu0 %v684
        %735 = vmatprep.subr.bf16.mxu0 0
        %736 = vmatpush1.bf16.msra.mxu0 0
        %737 = vmatprep.subr.bf16.mxu0 0
        %738 = vmatpush1.bf16.msra.mxu0 0
        %739 = vmatprep.subr.bf16.mxu0 0
        %740 = vmatpush1.bf16.msra.mxu0 0
        %741 = vmatprep.subr.bf16.mxu0 0
        %742 = vmatpush1.bf16.msra.mxu0 0
        %743 = vmatprep.subr.bf16.mxu0 0
        %744 = vmatpush1.bf16.msra.mxu0 0
        %745 = vmatprep.subr.bf16.mxu0 0
        %746 = vmatpush1.bf16.msra.mxu0 0
        %747 = vmatprep.subr.bf16.mxu0 0
        %748 = vmatpush1.bf16.msra.mxu0 0
        %749 = vmatprep.subr.bf16.mxu0 0
        %750 = vmatpush1.bf16.msra.mxu0 0
        %751 = vmatprep.subr.bf16.mxu0 0
        %752 = vmatpush1.bf16.msra.mxu0 0
        %753 = vmatprep.subr.bf16.mxu0 0
        %754 = vmatpush1.bf16.msra.mxu0 0
        %755 = vmatprep.subr.bf16.mxu0 0
        %756 = vmatpush1.bf16.msra.mxu0 0
        %757 = vmatprep.subr.bf16.mxu0 0
        %758 = vmatpush1.bf16.msra.mxu0 0
        %759 = vmatprep.subr.bf16.mxu0 0
        %760 = vmatpush1.bf16.msra.mxu0 0
        %761 = vmatprep.mubr.bf16.mxu0 0
        %762 = vmatmul.mubr.bf16.gmra.mrb[0].mxu0 %v724
        %v763 = vpop.f32.mrb[0].mxu0
        %v764 = vadd.f32 %v696, %v763
        %v765 = vpop.f32.mrb[0].mxu0
        %v766 = vpop.f32.mrb[0].mxu0
        %v767 = vadd.f32 %v701, %v766
        %v768 = vpop.f32.mrb[0].mxu0
        %769 = vmatprep.mubr.bf16.mxu0 0
        %770 = vmatmul.mubr.bf16.gmra.mrb[0].mxu0 %v727
        %v771 = vpop.f32.mrb[0].mxu0
        %v772 = vadd.f32 %v706, %v771
        %v773 = vpop.f32.mrb[0].mxu0
        %v774 = vpop.f32.mrb[0].mxu0
        %v775 = vadd.f32 %v711, %v774
        %v776 = vpop.f32.mrb[0].mxu0
        %777 = vdwg.mxu0
        %v778 = vtanh.pop %v764
        %v779 = vtanh.pop %v767
        %v780 = vxor.u32 %v772, 2147483648
        %v781 = vxor.u32 %v775, 2147483648
        %v782 = vmul.f32 %v780, 1.442695
        %v783 = vpow.pop %v782
        %v784 = vmul.f32 %v781, 1.442695
        %v785 = vpow.pop %v784
        %v786 = vadd.f32 %v783, 1.0
        %v787 = vadd.f32 %v785, 1.0
        %v788 = vrcp.pop %v786
        %v789 = vmul.f32 1.0, %v788
        %v790 = vrcp.pop %v787
        %v791 = vmul.f32 1.0, %v790
        %v792 = vmul.f32 %v778, %v789
        %v793 = vmul.f32 %v779, %v791
        %v794 = vpack.c.bf16 %v793, %v792
        %v795 = vld [vmem:[%s1 + $0x80] sm:$0xf]
        %v796 = vld [vmem:[%s1 + $0x84] sm:$0xf]
        %v797 = vld [vmem:[%s1 + $0x88] sm:$0xf]
        %v798 = vld [vmem:[%s1 + $0x8c] sm:$0xf]
        %v803 = vunpack.c.l.b16 %v795
        %v804 = vunpack.c.l.b16 %v796
        %v805 = vunpack.c.l.b16 %v797
        %v806 = vunpack.c.l.b16 %v798
        %v807 = vpack.c.b16 %v804, %v803
        %v808 = vpack.c.b16 %v806, %v805
        %v810 = vsel %vm384, %v807, 0
        %v813 = vsel %vm384, %v808, 0
        %815 = vmatprep.subr.bf16.mxu0 0
        %816 = vmatpush1.bf16.msra.mxu0 %v794
        %817 = vmatprep.subr.bf16.mxu0 0
        %818 = vmatpush1.bf16.msra.mxu0 0
        %819 = vmatprep.subr.bf16.mxu0 0
        %820 = vmatpush1.bf16.msra.mxu0 0
        %821 = vmatprep.subr.bf16.mxu0 0
        %822 = vmatpush1.bf16.msra.mxu0 0
        %823 = vmatprep.subr.bf16.mxu0 0
        %824 = vmatpush1.bf16.msra.mxu0 0
        %825 = vmatprep.subr.bf16.mxu0 0
        %826 = vmatpush1.bf16.msra.mxu0 0
        %827 = vmatprep.subr.bf16.mxu0 0
        %828 = vmatpush1.bf16.msra.mxu0 0
        %829 = vmatprep.subr.bf16.mxu0 0
        %830 = vmatpush1.bf16.msra.mxu0 0
        %831 = vmatprep.subr.bf16.mxu0 0
        %832 = vmatpush1.bf16.msra.mxu0 0
        %833 = vmatprep.subr.bf16.mxu0 0
        %834 = vmatpush1.bf16.msra.mxu0 0
        %835 = vmatprep.subr.bf16.mxu0 0
        %836 = vmatpush1.bf16.msra.mxu0 0
        %837 = vmatprep.subr.bf16.mxu0 0
        %838 = vmatpush1.bf16.msra.mxu0 0
        %839 = vmatprep.subr.bf16.mxu0 0
        %840 = vmatpush1.bf16.msra.mxu0 0
        %841 = vmatprep.subr.bf16.mxu0 0
        %842 = vmatpush1.bf16.msra.mxu0 0
        %843 = vmatprep.subr.bf16.mxu0 0
        %844 = vmatpush1.bf16.msra.mxu0 0
        %845 = vmatprep.subr.bf16.mxu0 0
        %846 = vmatpush1.bf16.msra.mxu0 0
        %847 = vmatprep.mubr.bf16.mxu0 0
        %848 = vmatmul.mubr.bf16.gmra.mrb[0].mxu0 %v810
        %v849 = vpop.f32.mrb[0].mxu0
        %v850 = vadd.f32 0.0, %v849
        %v851 = vpop.f32.mrb[0].mxu0
        %v852 = vpop.f32.mrb[0].mxu0
        %v853 = vadd.f32 0.0, %v852
        %v854 = vpop.f32.mrb[0].mxu0
        %855 = vmatprep.mubr.bf16.mxu0 0
        %856 = vmatmul.mubr.bf16.gmra.mrb[0].mxu0 %v813
        %v857 = vpop.f32.mrb[0].mxu0
        %v858 = vadd.f32 0.0, %v857
        %v859 = vpop.f32.mrb[0].mxu0
        %v860 = vpop.f32.mrb[0].mxu0
        %v861 = vpop.f32.mrb[0].mxu0
        %862 = vdwg.mxu0
        %v863 = vld [vmem:[%s2 + $0x110] sm:$0xff]
        %v864 = vld [vmem:[%s2 + $0x118] sm:$0xff]
        %866 = vset.pattern.permute.xlu0 0
        %867 = vperm.xlu0 %866, %v863
        %v868 = vpop.permute.xlu0 %867
        %871 = vset.pattern.permute.xlu0 0
        %872 = vperm.xlu0 %871, %v864
        %v873 = vpop.permute.xlu0 %872
        %v875 = vadd.f32 %v850, %v868
        %v876 = vadd.f32 %v853, %v873
        %v877 = vadd.f32 %v875, %v665
        %v878 = vadd.f32 %v876, %v666
        %v879 = vadd.f32 %v667, %v858
        %880 = vrot.lane.b32.xlu0 %v877, 2
        %v881 = vpop.permute.xlu0 %880
        %882 = vrot.lane.b32.xlu0 %v878, 2
        %v883 = vpop.permute.xlu0 %882
        %v884 = vsel %vm245, %v881, 0.0
        %v885 = vsel %vm245, %v883, 0.0
        %886 = vrot.lane.b32.xlu0 %v877, 1
        %v887 = vpop.permute.xlu0 %886
        %888 = vrot.lane.b32.xlu0 %v878, 1
        %v889 = vpop.permute.xlu0 %888
        %v890 = vsel %vm253, %v887, 0.0
        %v891 = vsel %vm253, %v889, 0.0
        %v892 = vpack.c.bf16 %v885, %v884
        %v893 = vpack.c.bf16 %v891, %v890
        %v894 = vpack.c.bf16 %v878, %v877
        %v895 = vld [vmem:[%s1 + $0x30] sm:$0xf]
        %v896 = vld [vmem:[%s1 + $0x34] sm:$0xf]
        %v897 = vld [vmem:[%s1 + $0x38] sm:$0xf]
        %v898 = vld [vmem:[%s1 + $0x3c] sm:$0xf]
        %v899 = vld [vmem:[%s2 + $0x90] sm:$0xff]
        %v900 = vld [vmem:[%s2 + $0x98] sm:$0xff]
        %v901 = vld [vmem:[%s2 + $0xa0] sm:$0xff]
        %v902 = vld [vmem:[%s2 + $0xa8] sm:$0xff]
        %904 = vset.pattern.permute.xlu0 0
        %905 = vperm.xlu0 %904, %v899
        %v906 = vpop.permute.xlu0 %905
        %909 = vset.pattern.permute.xlu0 0
        %910 = vperm.xlu0 %909, %v900
        %v911 = vpop.permute.xlu0 %910
        %914 = vset.pattern.permute.xlu0 0
        %915 = vperm.xlu0 %914, %v901
        %v916 = vpop.permute.xlu0 %915
        %919 = vset.pattern.permute.xlu0 0
        %920 = vperm.xlu0 %919, %v902
        %v921 = vpop.permute.xlu0 %920
        %v927 = vunpack.c.l.b16 %v895
        %v928 = vunpack.c.l.b16 %v896
        %v929 = vunpack.c.l.b16 %v897
        %v930 = vunpack.c.l.b16 %v898
        %v931 = vpack.c.b16 %v928, %v927
        %v932 = vpack.c.b16 %v930, %v929
        %v934 = vsel %vm297, %v931, 0
        %v937 = vsel %vm297, %v932, 0
        %939 = vmatprep.subr.bf16.mxu0 0
        %940 = vmatpush1.bf16.msra.mxu0 %v892
        %941 = vmatprep.subr.bf16.mxu0 0
        %942 = vmatpush1.bf16.msra.mxu0 %v893
        %943 = vmatprep.subr.bf16.mxu0 0
        %944 = vmatpush1.bf16.msra.mxu0 %v894
        %945 = vmatprep.subr.bf16.mxu0 0
        %946 = vmatpush1.bf16.msra.mxu0 0
        %947 = vmatprep.subr.bf16.mxu0 0
        %948 = vmatpush1.bf16.msra.mxu0 0
        %949 = vmatprep.subr.bf16.mxu0 0
        %950 = vmatpush1.bf16.msra.mxu0 0
        %951 = vmatprep.subr.bf16.mxu0 0
        %952 = vmatpush1.bf16.msra.mxu0 0
        %953 = vmatprep.subr.bf16.mxu0 0
        %954 = vmatpush1.bf16.msra.mxu0 0
        %955 = vmatprep.subr.bf16.mxu0 0
        %956 = vmatpush1.bf16.msra.mxu0 0
        %957 = vmatprep.subr.bf16.mxu0 0
        %958 = vmatpush1.bf16.msra.mxu0 0
        %959 = vmatprep.subr.bf16.mxu0 0
        %960 = vmatpush1.bf16.msra.mxu0 0
        %961 = vmatprep.subr.bf16.mxu0 0
        %962 = vmatpush1.bf16.msra.mxu0 0
        %963 = vmatprep.subr.bf16.mxu0 0
        %964 = vmatpush1.bf16.msra.mxu0 0
        %965 = vmatprep.subr.bf16.mxu0 0
        %966 = vmatpush1.bf16.msra.mxu0 0
        %967 = vmatprep.subr.bf16.mxu0 0
        %968 = vmatpush1.bf16.msra.mxu0 0
        %969 = vmatprep.subr.bf16.mxu0 0
        %970 = vmatpush1.bf16.msra.mxu0 0
        %971 = vmatprep.mubr.bf16.mxu0 0
        %972 = vmatmul.mubr.bf16.gmra.mrb[0].mxu0 %v934
        %v973 = vpop.f32.mrb[0].mxu0
        %v974 = vadd.f32 %v906, %v973
        %v975 = vpop.f32.mrb[0].mxu0
        %v976 = vpop.f32.mrb[0].mxu0
        %v977 = vadd.f32 %v911, %v976
        %v978 = vpop.f32.mrb[0].mxu0
        %979 = vmatprep.mubr.bf16.mxu0 0
        %980 = vmatmul.mubr.bf16.gmra.mrb[0].mxu0 %v937
        %v981 = vpop.f32.mrb[0].mxu0
        %v982 = vadd.f32 %v916, %v981
        %v983 = vpop.f32.mrb[0].mxu0
        %v984 = vpop.f32.mrb[0].mxu0
        %v985 = vadd.f32 %v921, %v984
        %v986 = vpop.f32.mrb[0].mxu0
        %987 = vdwg.mxu0
        %v988 = vtanh.pop %v974
        %v989 = vtanh.pop %v977
        %v990 = vxor.u32 %v982, 2147483648
        %v991 = vxor.u32 %v985, 2147483648
        %v992 = vmul.f32 %v990, 1.442695
        %v993 = vpow.pop %v992
        %v994 = vmul.f32 %v991, 1.442695
        %v995 = vpow.pop %v994
        %v996 = vadd.f32 %v993, 1.0
        %v997 = vadd.f32 %v995, 1.0
        %v998 = vrcp.pop %v996
        %v999 = vmul.f32 1.0, %v998
        %v1000 = vrcp.pop %v997
        %v1001 = vmul.f32 1.0, %v1000
        %v1002 = vmul.f32 %v988, %v999
        %v1003 = vmul.f32 %v989, %v1001
        %v1004 = vpack.c.bf16 %v1003, %v1002
        %v1005 = vld [vmem:[%s1 + $0x90] sm:$0xf]
        %v1006 = vld [vmem:[%s1 + $0x94] sm:$0xf]
        %v1007 = vld [vmem:[%s1 + $0x98] sm:$0xf]
        %v1008 = vld [vmem:[%s1 + $0x9c] sm:$0xf]
        %v1013 = vunpack.c.l.b16 %v1005
        %v1014 = vunpack.c.l.b16 %v1006
        %v1015 = vunpack.c.l.b16 %v1007
        %v1016 = vunpack.c.l.b16 %v1008
        %v1017 = vpack.c.b16 %v1014, %v1013
        %v1018 = vpack.c.b16 %v1016, %v1015
        %v1020 = vsel %vm384, %v1017, 0
        %v1023 = vsel %vm384, %v1018, 0
        %1025 = vmatprep.subr.bf16.mxu0 0
        %1026 = vmatpush1.bf16.msra.mxu0 %v1004
        %1027 = vmatprep.subr.bf16.mxu0 0
        %1028 = vmatpush1.bf16.msra.mxu0 0
        %1029 = vmatprep.subr.bf16.mxu0 0
        %1030 = vmatpush1.bf16.msra.mxu0 0
        %1031 = vmatprep.subr.bf16.mxu0 0
        %1032 = vmatpush1.bf16.msra.mxu0 0
        %1033 = vmatprep.subr.bf16.mxu0 0
        %1034 = vmatpush1.bf16.msra.mxu0 0
        %1035 = vmatprep.subr.bf16.mxu0 0
        %1036 = vmatpush1.bf16.msra.mxu0 0
        %1037 = vmatprep.subr.bf16.mxu0 0
        %1038 = vmatpush1.bf16.msra.mxu0 0
        %1039 = vmatprep.subr.bf16.mxu0 0
        %1040 = vmatpush1.bf16.msra.mxu0 0
        %1041 = vmatprep.subr.bf16.mxu0 0
        %1042 = vmatpush1.bf16.msra.mxu0 0
        %1043 = vmatprep.subr.bf16.mxu0 0
        %1044 = vmatpush1.bf16.msra.mxu0 0
        %1045 = vmatprep.subr.bf16.mxu0 0
        %1046 = vmatpush1.bf16.msra.mxu0 0
        %1047 = vmatprep.subr.bf16.mxu0 0
        %1048 = vmatpush1.bf16.msra.mxu0 0
        %1049 = vmatprep.subr.bf16.mxu0 0
        %1050 = vmatpush1.bf16.msra.mxu0 0
        %1051 = vmatprep.subr.bf16.mxu0 0
        %1052 = vmatpush1.bf16.msra.mxu0 0
        %1053 = vmatprep.subr.bf16.mxu0 0
        %1054 = vmatpush1.bf16.msra.mxu0 0
        %1055 = vmatprep.subr.bf16.mxu0 0
        %1056 = vmatpush1.bf16.msra.mxu0 0
        %1057 = vmatprep.mubr.bf16.mxu0 0
        %1058 = vmatmul.mubr.bf16.gmra.mrb[0].mxu0 %v1020
        %v1059 = vpop.f32.mrb[0].mxu0
        %v1060 = vadd.f32 0.0, %v1059
        %v1061 = vpop.f32.mrb[0].mxu0
        %v1062 = vpop.f32.mrb[0].mxu0
        %v1063 = vadd.f32 0.0, %v1062
        %v1064 = vpop.f32.mrb[0].mxu0
        %1065 = vmatprep.mubr.bf16.mxu0 0
        %1066 = vmatmul.mubr.bf16.gmra.mrb[0].mxu0 %v1023
        %v1067 = vpop.f32.mrb[0].mxu0
        %v1068 = vadd.f32 0.0, %v1067
        %v1069 = vpop.f32.mrb[0].mxu0
        %v1070 = vpop.f32.mrb[0].mxu0
        %v1071 = vpop.f32.mrb[0].mxu0
        %1072 = vdwg.mxu0
        %v1073 = vld [vmem:[%s2 + $0x120] sm:$0xff]
        %v1074 = vld [vmem:[%s2 + $0x128] sm:$0xff]
        %1076 = vset.pattern.permute.xlu0 0
        %1077 = vperm.xlu0 %1076, %v1073
        %v1078 = vpop.permute.xlu0 %1077
        %1081 = vset.pattern.permute.xlu0 0
        %1082 = vperm.xlu0 %1081, %v1074
        %v1083 = vpop.permute.xlu0 %1082
        %v1085 = vadd.f32 %v1060, %v1078
        %v1086 = vadd.f32 %v1063, %v1083
        %v1087 = vadd.f32 %v1085, %v877
        %v1088 = vadd.f32 %v1086, %v878
        %v1089 = vadd.f32 %v879, %v1068
        %1090 = vrot.lane.b32.xlu0 %v1087, 4
        %v1091 = vpop.permute.xlu0 %1090
        %1092 = vrot.lane.b32.xlu0 %v1088, 4
        %v1093 = vpop.permute.xlu0 %1092
        %v1094 = vsel %vm461, %v1091, 0.0
        %v1095 = vsel %vm461, %v1093, 0.0
        %1096 = vrot.lane.b32.xlu0 %v1087, 2
        %v1097 = vpop.permute.xlu0 %1096
        %1098 = vrot.lane.b32.xlu0 %v1088, 2
        %v1099 = vpop.permute.xlu0 %1098
        %v1100 = vsel %vm245, %v1097, 0.0
        %v1101 = vsel %vm245, %v1099, 0.0
        %v1102 = vpack.c.bf16 %v1095, %v1094
        %v1103 = vpack.c.bf16 %v1101, %v1100
        %v1104 = vpack.c.bf16 %v1088, %v1087
        %v1105 = vld [vmem:[%s1 + $0x40] sm:$0xf]
        %v1106 = vld [vmem:[%s1 + $0x44] sm:$0xf]
        %v1107 = vld [vmem:[%s1 + $0x48] sm:$0xf]
        %v1108 = vld [vmem:[%s1 + $0x4c] sm:$0xf]
        %v1109 = vld [vmem:[%s2 + $0xb0] sm:$0xff]
        %v1110 = vld [vmem:[%s2 + $0xb8] sm:$0xff]
        %v1111 = vld [vmem:[%s2 + $0xc0] sm:$0xff]
        %v1112 = vld [vmem:[%s2 + $0xc8] sm:$0xff]
        %1114 = vset.pattern.permute.xlu0 0
        %1115 = vperm.xlu0 %1114, %v1109
        %v1116 = vpop.permute.xlu0 %1115
        %1119 = vset.pattern.permute.xlu0 0
        %1120 = vperm.xlu0 %1119, %v1110
        %v1121 = vpop.permute.xlu0 %1120
        %1124 = vset.pattern.permute.xlu0 0
        %1125 = vperm.xlu0 %1124, %v1111
        %v1126 = vpop.permute.xlu0 %1125
        %1129 = vset.pattern.permute.xlu0 0
        %1130 = vperm.xlu0 %1129, %v1112
        %v1131 = vpop.permute.xlu0 %1130
        %v1137 = vunpack.c.l.b16 %v1105
        %v1138 = vunpack.c.l.b16 %v1106
        %v1139 = vunpack.c.l.b16 %v1107
        %v1140 = vunpack.c.l.b16 %v1108
        %v1141 = vpack.c.b16 %v1138, %v1137
        %v1142 = vpack.c.b16 %v1140, %v1139
        %v1144 = vsel %vm297, %v1141, 0
        %v1147 = vsel %vm297, %v1142, 0
        %1149 = vmatprep.subr.bf16.mxu0 0
        %1150 = vmatpush1.bf16.msra.mxu0 %v1102
        %1151 = vmatprep.subr.bf16.mxu0 0
        %1152 = vmatpush1.bf16.msra.mxu0 %v1103
        %1153 = vmatprep.subr.bf16.mxu0 0
        %1154 = vmatpush1.bf16.msra.mxu0 %v1104
        %1155 = vmatprep.subr.bf16.mxu0 0
        %1156 = vmatpush1.bf16.msra.mxu0 0
        %1157 = vmatprep.subr.bf16.mxu0 0
        %1158 = vmatpush1.bf16.msra.mxu0 0
        %1159 = vmatprep.subr.bf16.mxu0 0
        %1160 = vmatpush1.bf16.msra.mxu0 0
        %1161 = vmatprep.subr.bf16.mxu0 0
        %1162 = vmatpush1.bf16.msra.mxu0 0
        %1163 = vmatprep.subr.bf16.mxu0 0
        %1164 = vmatpush1.bf16.msra.mxu0 0
        %1165 = vmatprep.subr.bf16.mxu0 0
        %1166 = vmatpush1.bf16.msra.mxu0 0
        %1167 = vmatprep.subr.bf16.mxu0 0
        %1168 = vmatpush1.bf16.msra.mxu0 0
        %1169 = vmatprep.subr.bf16.mxu0 0
        %1170 = vmatpush1.bf16.msra.mxu0 0
        %1171 = vmatprep.subr.bf16.mxu0 0
        %1172 = vmatpush1.bf16.msra.mxu0 0
        %1173 = vmatprep.subr.bf16.mxu0 0
        %1174 = vmatpush1.bf16.msra.mxu0 0
        %1175 = vmatprep.subr.bf16.mxu0 0
        %1176 = vmatpush1.bf16.msra.mxu0 0
        %1177 = vmatprep.subr.bf16.mxu0 0
        %1178 = vmatpush1.bf16.msra.mxu0 0
        %1179 = vmatprep.subr.bf16.mxu0 0
        %1180 = vmatpush1.bf16.msra.mxu0 0
        %1181 = vmatprep.mubr.bf16.mxu0 0
        %1182 = vmatmul.mubr.bf16.gmra.mrb[0].mxu0 %v1144
        %v1183 = vpop.f32.mrb[0].mxu0
        %v1184 = vadd.f32 %v1116, %v1183
        %v1185 = vpop.f32.mrb[0].mxu0
        %v1186 = vpop.f32.mrb[0].mxu0
        %v1187 = vadd.f32 %v1121, %v1186
        %v1188 = vpop.f32.mrb[0].mxu0
        %1189 = vmatprep.mubr.bf16.mxu0 0
        %1190 = vmatmul.mubr.bf16.gmra.mrb[0].mxu0 %v1147
        %v1191 = vpop.f32.mrb[0].mxu0
        %v1192 = vadd.f32 %v1126, %v1191
        %v1193 = vpop.f32.mrb[0].mxu0
        %v1194 = vpop.f32.mrb[0].mxu0
        %v1195 = vadd.f32 %v1131, %v1194
        %v1196 = vpop.f32.mrb[0].mxu0
        %1197 = vdwg.mxu0
        %v1198 = vtanh.pop %v1184
        %v1199 = vtanh.pop %v1187
        %v1200 = vxor.u32 %v1192, 2147483648
        %v1201 = vxor.u32 %v1195, 2147483648
        %v1202 = vmul.f32 %v1200, 1.442695
        %v1203 = vpow.pop %v1202
        %v1204 = vmul.f32 %v1201, 1.442695
        %v1205 = vpow.pop %v1204
        %v1206 = vadd.f32 %v1203, 1.0
        %v1207 = vadd.f32 %v1205, 1.0
        %v1208 = vrcp.pop %v1206
        %v1209 = vmul.f32 1.0, %v1208
        %v1210 = vrcp.pop %v1207
        %v1211 = vmul.f32 1.0, %v1210
        %v1212 = vmul.f32 %v1198, %v1209
        %v1213 = vmul.f32 %v1199, %v1211
        %v1214 = vpack.c.bf16 %v1213, %v1212
        %v1215 = vld [vmem:[%s1 + $0xa0] sm:$0xf]
        %v1216 = vld [vmem:[%s1 + $0xa4] sm:$0xf]
        %v1217 = vld [vmem:[%s1 + $0xa8] sm:$0xf]
        %v1218 = vld [vmem:[%s1 + $0xac] sm:$0xf]
        %v1223 = vunpack.c.l.b16 %v1215
        %v1224 = vunpack.c.l.b16 %v1216
        %v1225 = vunpack.c.l.b16 %v1217
        %v1226 = vunpack.c.l.b16 %v1218
        %v1227 = vpack.c.b16 %v1224, %v1223
        %v1228 = vpack.c.b16 %v1226, %v1225
        %v1230 = vsel %vm384, %v1227, 0
        %v1233 = vsel %vm384, %v1228, 0
        %1235 = vmatprep.subr.bf16.mxu0 0
        %1236 = vmatpush1.bf16.msra.mxu0 %v1214
        %1237 = vmatprep.subr.bf16.mxu0 0
        %1238 = vmatpush1.bf16.msra.mxu0 0
        %1239 = vmatprep.subr.bf16.mxu0 0
        %1240 = vmatpush1.bf16.msra.mxu0 0
        %1241 = vmatprep.subr.bf16.mxu0 0
        %1242 = vmatpush1.bf16.msra.mxu0 0
        %1243 = vmatprep.subr.bf16.mxu0 0
        %1244 = vmatpush1.bf16.msra.mxu0 0
        %1245 = vmatprep.subr.bf16.mxu0 0
        %1246 = vmatpush1.bf16.msra.mxu0 0
        %1247 = vmatprep.subr.bf16.mxu0 0
        %1248 = vmatpush1.bf16.msra.mxu0 0
        %1249 = vmatprep.subr.bf16.mxu0 0
        %1250 = vmatpush1.bf16.msra.mxu0 0
        %1251 = vmatprep.subr.bf16.mxu0 0
        %1252 = vmatpush1.bf16.msra.mxu0 0
        %1253 = vmatprep.subr.bf16.mxu0 0
        %1254 = vmatpush1.bf16.msra.mxu0 0
        %1255 = vmatprep.subr.bf16.mxu0 0
        %1256 = vmatpush1.bf16.msra.mxu0 0
        %1257 = vmatprep.subr.bf16.mxu0 0
        %1258 = vmatpush1.bf16.msra.mxu0 0
        %1259 = vmatprep.subr.bf16.mxu0 0
        %1260 = vmatpush1.bf16.msra.mxu0 0
        %1261 = vmatprep.subr.bf16.mxu0 0
        %1262 = vmatpush1.bf16.msra.mxu0 0
        %1263 = vmatprep.subr.bf16.mxu0 0
        %1264 = vmatpush1.bf16.msra.mxu0 0
        %1265 = vmatprep.subr.bf16.mxu0 0
        %1266 = vmatpush1.bf16.msra.mxu0 0
        %1267 = vmatprep.mubr.bf16.mxu0 0
        %1268 = vmatmul.mubr.bf16.gmra.mrb[0].mxu0 %v1230
        %v1269 = vpop.f32.mrb[0].mxu0
        %v1270 = vadd.f32 0.0, %v1269
        %v1271 = vpop.f32.mrb[0].mxu0
        %v1272 = vpop.f32.mrb[0].mxu0
        %v1273 = vadd.f32 0.0, %v1272
        %v1274 = vpop.f32.mrb[0].mxu0
        %1275 = vmatprep.mubr.bf16.mxu0 0
        %1276 = vmatmul.mubr.bf16.gmra.mrb[0].mxu0 %v1233
        %v1277 = vpop.f32.mrb[0].mxu0
        %v1278 = vadd.f32 0.0, %v1277
        %v1279 = vpop.f32.mrb[0].mxu0
        %v1280 = vpop.f32.mrb[0].mxu0
        %v1281 = vpop.f32.mrb[0].mxu0
        %1282 = vdwg.mxu0
        %v1283 = vld [vmem:[%s2 + $0x130] sm:$0xff]
        %v1284 = vld [vmem:[%s2 + $0x138] sm:$0xff]
        %1286 = vset.pattern.permute.xlu0 0
        %1287 = vperm.xlu0 %1286, %v1283
        %v1288 = vpop.permute.xlu0 %1287
        %1291 = vset.pattern.permute.xlu0 0
        %1292 = vperm.xlu0 %1291, %v1284
        %v1293 = vpop.permute.xlu0 %1292
        %v1295 = vadd.f32 %v1270, %v1288
        %v1296 = vadd.f32 %v1273, %v1293
        %v1297 = vadd.f32 %v1295, %v1087
        %v1298 = vadd.f32 %v1296, %v1088
        %v1299 = vadd.f32 %v1089, %v1278
        %1300 = vrot.lane.b32.xlu0 %v1297, 8
        %v1301 = vpop.permute.xlu0 %1300
        %1302 = vrot.lane.b32.xlu0 %v1298, 8
        %v1303 = vpop.permute.xlu0 %1302
        %v1304 = vsel %vm673, %v1301, 0.0
        %v1305 = vsel %vm673, %v1303, 0.0
        %1306 = vrot.lane.b32.xlu0 %v1297, 4
        %v1307 = vpop.permute.xlu0 %1306
        %1308 = vrot.lane.b32.xlu0 %v1298, 4
        %v1309 = vpop.permute.xlu0 %1308
        %v1310 = vsel %vm461, %v1307, 0.0
        %v1311 = vsel %vm461, %v1309, 0.0
        %v1312 = vpack.c.bf16 %v1305, %v1304
        %v1313 = vpack.c.bf16 %v1311, %v1310
        %v1314 = vpack.c.bf16 %v1298, %v1297
        %v1315 = vld [vmem:[%s1 + $0x50] sm:$0xf]
        %v1316 = vld [vmem:[%s1 + $0x54] sm:$0xf]
        %v1317 = vld [vmem:[%s1 + $0x58] sm:$0xf]
        %v1318 = vld [vmem:[%s1 + $0x5c] sm:$0xf]
        %v1319 = vld [vmem:[%s2 + $0xd0] sm:$0xff]
        %v1320 = vld [vmem:[%s2 + $0xd8] sm:$0xff]
        %v1321 = vld [vmem:[%s2 + $0xe0] sm:$0xff]
        %v1322 = vld [vmem:[%s2 + $0xe8] sm:$0xff]
        %1324 = vset.pattern.permute.xlu0 0
        %1325 = vperm.xlu0 %1324, %v1319
        %v1326 = vpop.permute.xlu0 %1325
        %1329 = vset.pattern.permute.xlu0 0
        %1330 = vperm.xlu0 %1329, %v1320
        %v1331 = vpop.permute.xlu0 %1330
        %1334 = vset.pattern.permute.xlu0 0
        %1335 = vperm.xlu0 %1334, %v1321
        %v1336 = vpop.permute.xlu0 %1335
        %1339 = vset.pattern.permute.xlu0 0
        %1340 = vperm.xlu0 %1339, %v1322
        %v1341 = vpop.permute.xlu0 %1340
        %v1347 = vunpack.c.l.b16 %v1315
        %v1348 = vunpack.c.l.b16 %v1316
        %v1349 = vunpack.c.l.b16 %v1317
        %v1350 = vunpack.c.l.b16 %v1318
        %v1351 = vpack.c.b16 %v1348, %v1347
        %v1352 = vpack.c.b16 %v1350, %v1349
        %v1354 = vsel %vm297, %v1351, 0
        %v1357 = vsel %vm297, %v1352, 0
        %1359 = vmatprep.subr.bf16.mxu0 0
        %1360 = vmatpush1.bf16.msra.mxu0 %v1312
        %1361 = vmatprep.subr.bf16.mxu0 0
        %1362 = vmatpush1.bf16.msra.mxu0 %v1313
        %1363 = vmatprep.subr.bf16.mxu0 0
        %1364 = vmatpush1.bf16.msra.mxu0 %v1314
        %1365 = vmatprep.subr.bf16.mxu0 0
        %1366 = vmatpush1.bf16.msra.mxu0 0
        %1367 = vmatprep.subr.bf16.mxu0 0
        %1368 = vmatpush1.bf16.msra.mxu0 0
        %1369 = vmatprep.subr.bf16.mxu0 0
        %1370 = vmatpush1.bf16.msra.mxu0 0
        %1371 = vmatprep.subr.bf16.mxu0 0
        %1372 = vmatpush1.bf16.msra.mxu0 0
        %1373 = vmatprep.subr.bf16.mxu0 0
        %1374 = vmatpush1.bf16.msra.mxu0 0
        %1375 = vmatprep.subr.bf16.mxu0 0
        %1376 = vmatpush1.bf16.msra.mxu0 0
        %1377 = vmatprep.subr.bf16.mxu0 0
        %1378 = vmatpush1.bf16.msra.mxu0 0
        %1379 = vmatprep.subr.bf16.mxu0 0
        %1380 = vmatpush1.bf16.msra.mxu0 0
        %1381 = vmatprep.subr.bf16.mxu0 0
        %1382 = vmatpush1.bf16.msra.mxu0 0
        %1383 = vmatprep.subr.bf16.mxu0 0
        %1384 = vmatpush1.bf16.msra.mxu0 0
        %1385 = vmatprep.subr.bf16.mxu0 0
        %1386 = vmatpush1.bf16.msra.mxu0 0
        %1387 = vmatprep.subr.bf16.mxu0 0
        %1388 = vmatpush1.bf16.msra.mxu0 0
        %1389 = vmatprep.subr.bf16.mxu0 0
        %1390 = vmatpush1.bf16.msra.mxu0 0
        %1391 = vmatprep.mubr.bf16.mxu0 0
        %1392 = vmatmul.mubr.bf16.gmra.mrb[0].mxu0 %v1354
        %v1393 = vpop.f32.mrb[0].mxu0
        %v1394 = vadd.f32 %v1326, %v1393
        %v1395 = vpop.f32.mrb[0].mxu0
        %v1396 = vpop.f32.mrb[0].mxu0
        %v1397 = vadd.f32 %v1331, %v1396
        %v1398 = vpop.f32.mrb[0].mxu0
        %1399 = vmatprep.mubr.bf16.mxu0 0
        %1400 = vmatmul.mubr.bf16.gmra.mrb[0].mxu0 %v1357
        %v1401 = vpop.f32.mrb[0].mxu0
        %v1402 = vadd.f32 %v1336, %v1401
        %v1403 = vpop.f32.mrb[0].mxu0
        %v1404 = vpop.f32.mrb[0].mxu0
        %v1405 = vadd.f32 %v1341, %v1404
        %v1406 = vpop.f32.mrb[0].mxu0
        %1407 = vdwg.mxu0
        %v1408 = vtanh.pop %v1394
        %v1409 = vtanh.pop %v1397
        %v1410 = vxor.u32 %v1402, 2147483648
        %v1411 = vxor.u32 %v1405, 2147483648
        %v1412 = vmul.f32 %v1410, 1.442695
        %v1413 = vpow.pop %v1412
        %v1414 = vmul.f32 %v1411, 1.442695
        %v1415 = vpow.pop %v1414
        %v1416 = vadd.f32 %v1413, 1.0
        %v1417 = vadd.f32 %v1415, 1.0
        %v1418 = vrcp.pop %v1416
        %v1419 = vmul.f32 1.0, %v1418
        %v1420 = vrcp.pop %v1417
        %v1421 = vmul.f32 1.0, %v1420
        %v1422 = vmul.f32 %v1408, %v1419
        %v1423 = vmul.f32 %v1409, %v1421
        %v1424 = vpack.c.bf16 %v1423, %v1422
        %v1425 = vld [vmem:[%s1 + $0xb0] sm:$0xf]
        %v1426 = vld [vmem:[%s1 + $0xb4] sm:$0xf]
        %v1427 = vld [vmem:[%s1 + $0xb8] sm:$0xf]
        %v1428 = vld [vmem:[%s1 + $0xbc] sm:$0xf]
        %v1433 = vunpack.c.l.b16 %v1425
        %v1434 = vunpack.c.l.b16 %v1426
        %v1435 = vunpack.c.l.b16 %v1427
        %v1436 = vunpack.c.l.b16 %v1428
        %v1437 = vpack.c.b16 %v1434, %v1433
        %v1438 = vpack.c.b16 %v1436, %v1435
        %v1440 = vsel %vm384, %v1437, 0
        %v1443 = vsel %vm384, %v1438, 0
        %1445 = vmatprep.subr.bf16.mxu0 0
        %1446 = vmatpush1.bf16.msra.mxu0 %v1424
        %1447 = vmatprep.subr.bf16.mxu0 0
        %1448 = vmatpush1.bf16.msra.mxu0 0
        %1449 = vmatprep.subr.bf16.mxu0 0
        %1450 = vmatpush1.bf16.msra.mxu0 0
        %1451 = vmatprep.subr.bf16.mxu0 0
        %1452 = vmatpush1.bf16.msra.mxu0 0
        %1453 = vmatprep.subr.bf16.mxu0 0
        %1454 = vmatpush1.bf16.msra.mxu0 0
        %1455 = vmatprep.subr.bf16.mxu0 0
        %1456 = vmatpush1.bf16.msra.mxu0 0
        %1457 = vmatprep.subr.bf16.mxu0 0
        %1458 = vmatpush1.bf16.msra.mxu0 0
        %1459 = vmatprep.subr.bf16.mxu0 0
        %1460 = vmatpush1.bf16.msra.mxu0 0
        %1461 = vmatprep.subr.bf16.mxu0 0
        %1462 = vmatpush1.bf16.msra.mxu0 0
        %1463 = vmatprep.subr.bf16.mxu0 0
        %1464 = vmatpush1.bf16.msra.mxu0 0
        %1465 = vmatprep.subr.bf16.mxu0 0
        %1466 = vmatpush1.bf16.msra.mxu0 0
        %1467 = vmatprep.subr.bf16.mxu0 0
        %1468 = vmatpush1.bf16.msra.mxu0 0
        %1469 = vmatprep.subr.bf16.mxu0 0
        %1470 = vmatpush1.bf16.msra.mxu0 0
        %1471 = vmatprep.subr.bf16.mxu0 0
        %1472 = vmatpush1.bf16.msra.mxu0 0
        %1473 = vmatprep.subr.bf16.mxu0 0
        %1474 = vmatpush1.bf16.msra.mxu0 0
        %1475 = vmatprep.subr.bf16.mxu0 0
        %1476 = vmatpush1.bf16.msra.mxu0 0
        %1477 = vmatprep.mubr.bf16.mxu0 0
        %1478 = vmatmul.mubr.bf16.gmra.mrb[0].mxu0 %v1440
        %v1479 = vpop.f32.mrb[0].mxu0
        %v1480 = vpop.f32.mrb[0].mxu0
        %v1481 = vpop.f32.mrb[0].mxu0
        %v1482 = vpop.f32.mrb[0].mxu0
        %1483 = vmatprep.mubr.bf16.mxu0 0
        %1484 = vmatmul.mubr.bf16.gmra.mrb[0].mxu0 %v1443
        %v1485 = vpop.f32.mrb[0].mxu0
        %v1486 = vadd.f32 0.0, %v1485
        %v1487 = vpop.f32.mrb[0].mxu0
        %v1488 = vpop.f32.mrb[0].mxu0
        %v1489 = vpop.f32.mrb[0].mxu0
        %1490 = vdwg.mxu0
        %v1491 = vadd.f32 %v1299, %v1486
        %v1492 = vld [vmem:[%s2 + $0x150] sm:$0x3]
        %1494 = vset.pattern.permute.xlu0 0
        %1495 = vperm.xlu0 %1494, %v1492
        %v1496 = vpop.permute.xlu0 %1495
        %v1498 = vadd.f32 %v1491, %v1496
        %1499 = vst [vmem:[%s161] sm:$0x3] %v1498
        %s1500 = sand.u32 %s93, 1
        %s1501 = scalar_lea.sflag [#allocation3], %s1500
        %s1502 = sand.u32 %s93, 1
        %s1503 = smul.addr %s1502, 2
        %s1504 = scalar_lea.vmem [#allocation2], %s1503
        // Predicated region
        $region33: #{wavenet_forward.1} parent=31 // pred_check
          %p1505 = pneg %p103
        $region34: #{wavenet_forward.1} parent=31 // pred_check_branch
          %1507 = sbr.rel (%p1505) target = $region36
        $region35: #{wavenet_forward.1} parent=31 // pred_region
          %s1509 = ssub.s32 32, 32
          %1510 = vsyncadd %s1501, %s1509
          %s1511 = smul.addr %s17, 32
          %s1512 = scalar_lea.hbm %s3, %s1511
          %s1514 = sshll.u32 %s1504, 4
          %s1515 = int_to_ptr.vmem [resolvable:$true] %s1514
          %1517 = dma.vmem_to_hbm [thread:$0]  %s1515, 32, %s1512, %s1501
        $region36: #{wavenet_forward.1} parent=31 // pred_fallthru
          _
      $region32: #{wavenet_forward.1} parent=5 // pred_fallthru
        _
      %p1518 = scmp.le.s32.totalorder 2, %s12
      // Predicated region
      $region37: #{wavenet_forward.1} parent=5 // pred_check
        %p1519 = pneg %p1518
      $region38: #{wavenet_forward.1} parent=5 // pred_check_branch
        %1521 = sbr.rel (%p1519) target = $region40
      $region39: #{wavenet_forward.1} parent=5 // pred_region
        %s1522 = ssub.s32 %s12, 2
        // Predicated region
        $region41: #{wavenet_forward.1} parent=39 // pred_check
          %p1523 = pneg %p109
        $region42: #{wavenet_forward.1} parent=39 // pred_check_branch
          %1525 = sbr.rel (%p1523) target = $region44
        $region43: #{wavenet_forward.1} parent=39 // pred_region
          %s1526 = sand.u32 %s94, 1
          %s1527 = scalar_lea.sflag [#allocation3], %s1526
          %s1528 = sand.u32 %s94, 1
          %s1529 = smul.addr %s1528, 2
          %s1530 = scalar_lea.vmem [#allocation2], %s1529
          %1531 = dma.done %s1527, 32
        $region44: #{wavenet_forward.1} parent=39 // pred_fallthru
          _
      $region40: #{wavenet_forward.1} parent=5 // pred_fallthru
        _
    $region6: #{wavenet_forward.1} parent=1 // loop_footer
      %s16 = sadd.s32 1, %s12
    $region7: #{wavenet_forward.1} parent=1 // loop_footer_branch
      %11 = sbr.rel target = $region3
    $region8: #{wavenet_forward.1} parent=1 // loop_exit
      _
    %1532 = vsyncpa [#allocation3], 1
    %s1533 = scalar_lea.sflag [#allocation3], 1
    %1534 = vsyncpa %s1533, 1

</llo_original>
